<compile_context>
chip_gen: v5e
topology: v5e:2x2
jax: 0.10.0
libtpu: 0.0.40
codegen_flags: <defaults>
</compile_context>

<pallas_src>
import jax
import jax.numpy as jnp
from jax import lax
from jax.experimental import pallas as pl
from jax.experimental.pallas import tpu as pltpu

# ----------------------------- static config --------------------------------
B, T, F = 2, 16, 4          # batch, n_steps, n_features
BT = B * T                  # folded row count (32)
L = 2                       # n_layers
D = 32                      # d_model
H = 2                       # n_heads
DH = D // H                 # head dim
DFF = 64                    # d_ffn
HBT = H * BT                # heads folded into rows (64)
BUCKET_SIZE = 4             # (unused in dense-attention limit)
N_HASHES = 2                # (unused in dense-attention limit)
CAUSAL = False

NEG_SELF = -5e4             # reformer TOKEN_SELF_ATTN_VALUE
NEG_MASK = -1e9

# ------------------------ packed-slab row layout ------------------------------
ROWS_PER_LAYER = 7
R_BO, R_LN1G, R_LN1B, R_B1, R_B2, R_LNFG, R_LNFB = range(ROWS_PER_LAYER)
R_BOUT = L * ROWS_PER_LAYER          # row 14: output-projection bias (F lanes)
R_WOUT = 16                          # rows 16..16+D-1: W_out, sublane aligned
R_WEMB = R_WOUT + D                  # rows 48..48+2F: [w_emb ; b_emb]
SLAB_ROWS = 64


def _layernorm(x, gamma, beta, eps):
    mu = jnp.mean(x, axis=-1, keepdims=True)
    var = jnp.mean((x - mu) ** 2, axis=-1, keepdims=True)
    return (x - mu) * lax.rsqrt(var + eps) * gamma + beta


# ------------------------------- kernel --------------------------------------
def _reformer_kernel(xm_ref,        # (BT, 2F+1)   [X | mask | 1]
                     bias_ref,      # (HBT, HBT)   additive attention bias
                     wproj_ref,     # (L, D, 3D)   [W_qk*scale | Wv0@Wo0 | Wv1@Wo1]
                     w1_ref,        # (L, D, DFF)
                     w2_ref,        # (L, DFF, D)
                     slab_ref,      # (SLAB_ROWS, 128)  packed vectors + W_out + W_emb
                     out_ref):      # (BT, F)
    def vec(row, width):            # one packed parameter row -> (1, width)
        return slab_ref[row:row + 1, :][:, :width]

    xm = xm_ref[...]                                   # (BT, 2F+1)
    bias = bias_ref[...]                               # (HBT, HBT)

    # SAITS embedding: ones column folds the bias into a single matmul.
    w_emb = slab_ref[R_WEMB:R_WEMB + 2 * F + 1, :][:, :D]          # (2F+1, D)
    h = jnp.dot(xm, w_emb, preferred_element_type=jnp.float32)     # (BT, D)

    for l in range(L):                                 # static unrolled layer loop
        base = l * ROWS_PER_LAYER

        # fused projection: q (scaled) and per-head (Wv @ Wo) in one matmul
        proj = jnp.dot(h, wproj_ref[l], preferred_element_type=jnp.float32)  # (BT, 3D)

        # stack the heads along rows -> one block-diagonal attention instance
        q = jnp.concatenate([proj[:, 0:DH], proj[:, DH:D]], axis=0)           # (HBT, DH)
        v = jnp.concatenate([proj[:, D:2 * D], proj[:, 2 * D:3 * D]], axis=0) # (HBT, D)

        # shared-QK: keys are L2-normalized queries (rsqrt -> EUP);
        # the scale folded into W_qk cancels in the normalization.
        k = q * lax.rsqrt(jnp.maximum(jnp.sum(q * q, axis=-1, keepdims=True), 1e-24))
        s = pl.dot(q, k, trans_b=True) + bias                                  # (HBT, HBT)
        s = s - jnp.max(s, axis=-1, keepdims=True)
        p = jnp.exp(s)
        p = p * pl.reciprocal(jnp.sum(p, axis=-1, keepdims=True), approx=True)
        attn = jnp.dot(p, v, preferred_element_type=jnp.float32)               # (HBT, D)
        attn = attn[:BT, :] + attn[BT:, :] + vec(base + R_BO, D)               # (BT, D)

        # residual + post layer-norm (nn.LayerNorm default eps = 1e-5)
        h = _layernorm(attn + h, vec(base + R_LN1G, D), vec(base + R_LN1B, D), 1e-5)

        # position-wise FFN: pre-norm (eps = 1e-6), Linear-ReLU-Linear, +residual
        resid = h
        y = _layernorm(h, vec(base + R_LNFG, D), vec(base + R_LNFB, D), 1e-6)
        y = jnp.maximum(jnp.dot(y, w1_ref[l], preferred_element_type=jnp.float32)
                        + vec(base + R_B1, DFF), 0.0)
        y = (jnp.dot(y, w2_ref[l], preferred_element_type=jnp.float32)
             + vec(base + R_B2, D))
        h = y + resid

    # output projection + imputation
    wout = slab_ref[R_WOUT:R_WOUT + D, :][:, :F]                               # (D, F)
    recon = jnp.dot(h, wout, preferred_element_type=jnp.float32) + vec(R_BOUT, F)
    x = xm[:, :F]
    m = xm[:, F:2 * F]
    out_ref[...] = m * x + (1.0 - m) * recon


# ------------------------------ wrapper ---------------------------------------
@jax.jit
def reformer_forward(X, missing_mask, kparams):
    # Pre-concat [X | mask | 1] and fold batch into rows in the wrapper (free in XLA).
    ones = jnp.ones(X.shape[:-1] + (1,), X.dtype)
    xm = jnp.concatenate([X, missing_mask, ones], axis=-1).reshape(BT, 2 * F + 1)

    vmem = pl.BlockSpec(memory_space=pltpu.MemorySpace.VMEM)
    out = pl.pallas_call(
        _reformer_kernel,
        out_shape=jax.ShapeDtypeStruct((BT, F), jnp.float32),
        in_specs=[vmem] * (1 + len(kparams)),     # whole arrays, single-buffered
        out_specs=vmem,
    )(xm, *kparams)
    return out.reshape(B, T, F)


# --------------------------- pure-JAX reference -------------------------------
def reference_forward(X, m, params):
    (w_emb, b_emb, wqk, wv, wo, bo, ln1g, ln1b,
     w1, b1, w2, b2, lnfg, lnfb, wout, bout) = params
    hp = lax.Precision.HIGHEST
    xm = jnp.concatenate([X, m], axis=-1)
    h = jnp.einsum('btf,fd->btd', xm, w_emb, precision=hp) + b_emb[0]
    row = lax.broadcasted_iota(jnp.int32, (T, T), 0)
    col = lax.broadcasted_iota(jnp.int32, (T, T), 1)
    self_mask = row == col
    scale = DH ** -0.5
    for l in range(L):
        qk = jnp.einsum('btd,de->bte', h, wqk[l], precision=hp)
        v = jnp.einsum('btd,de->bte', h, wv[l], precision=hp)
        heads = []
        for hd in range(H):
            q = qk[..., hd * DH:(hd + 1) * DH]
            vh = v[..., hd * DH:(hd + 1) * DH]
            knorm = jnp.sqrt(jnp.sum(q * q, axis=-1, keepdims=True))
            k = q / jnp.maximum(knorm, 1e-12)
            s = jnp.einsum('bid,bjd->bij', q, k, precision=hp) * scale
            s = jnp.where(self_mask, NEG_SELF, s)
            if CAUSAL:
                s = jnp.where(col > row, NEG_MASK, s)
            p = jax.nn.softmax(s, axis=-1)
            heads.append(jnp.einsum('bij,bjd->bid', p, vh, precision=hp))
        attn = jnp.concatenate(heads, axis=-1)
        attn = jnp.einsum('btd,de->bte', attn, wo[l], precision=hp) + bo[l]
        h = _layernorm(attn + h, ln1g[l], ln1b[l], 1e-5)
        resid = h
        y = _layernorm(h, lnfg[l], lnfb[l], 1e-6)
        y = jnp.maximum(jnp.einsum('btd,df->btf', y, w1[l], precision=hp) + b1[l], 0.0)
        y = jnp.einsum('btf,fd->btd', y, w2[l], precision=hp) + b2[l]
        h = y + resid
    recon = jnp.einsum('btd,df->btf', h, wout, precision=hp) + bout[0]
    return m * X + (1.0 - m) * recon


# ------------------------------ params ----------------------------------------
def init_params(key):
    ks = jax.random.split(key, 16)
    n = lambda k, shape, s=0.1: (s * jax.random.normal(k, shape)).astype(jnp.float32)
    w_emb = n(ks[0], (2 * F, D))
    b_emb = n(ks[1], (1, D), 0.02)
    wqk = n(ks[2], (L, D, D))
    wv = n(ks[3], (L, D, D))
    wo = n(ks[4], (L, D, D))
    bo = n(ks[5], (L, D), 0.02)
    ln1g = jnp.ones((L, D), jnp.float32)
    ln1b = jnp.zeros((L, D), jnp.float32)
    w1 = n(ks[6], (L, D, DFF))
    b1 = n(ks[7], (L, DFF), 0.02)
    w2 = n(ks[8], (L, DFF, D))
    b2 = n(ks[9], (L, D), 0.02)
    lnfg = jnp.ones((L, D), jnp.float32)
    lnfb = jnp.zeros((L, D), jnp.float32)
    wout = n(ks[10], (D, F))
    bout = n(ks[11], (1, F), 0.02)
    return (w_emb, b_emb, wqk, wv, wo, bo, ln1g, ln1b,
            w1, b1, w2, b2, lnfg, lnfb, wout, bout)


def _attn_bias():
    """(HBT, HBT) additive bias: heads and batches form 16-row blocks; cross-block
    entries get NEG_MASK, the diagonal (self token) gets NEG_SELF."""
    idx = jnp.arange(HBT)
    same_blk = (idx[:, None] // T) == (idx[None, :] // T)   # same head AND same batch
    bias = jnp.where(same_blk, 0.0, NEG_MASK)
    if CAUSAL:
        tok = idx % T
        bias = jnp.where(same_blk & (tok[None, :] > tok[:, None]), NEG_MASK, bias)
    bias = jnp.where(idx[:, None] == idx[None, :], NEG_SELF, bias)
    return bias.astype(jnp.float32)


def pack_params(params):
    """Repack natural (per-module) weights into the fused kernel layout."""
    (w_emb, b_emb, wqk, wv, wo, bo, ln1g, ln1b,
     w1, b1, w2, b2, lnfg, lnfb, wout, bout) = params
    scale = DH ** -0.5

    # fold the attention scale into W_qk (exact: keys are normalized queries)
    wqk_s = (wqk * scale).astype(jnp.float32)
    # fold W_o into W_v per head: Wvo_h = Wv[:, h-cols] @ Wo[h-rows, :]
    wvo = [jnp.einsum('lde,lef->ldf', wv[:, :, hd * DH:(hd + 1) * DH],
                      wo[:, hd * DH:(hd + 1) * DH, :]) for hd in range(H)]
    wproj = jnp.concatenate([wqk_s] + wvo, axis=-1)          # (L, D, D + H*D)

    # pack all tiny vectors / small weights into one (SLAB_ROWS, 128) slab
    slab = jnp.zeros((SLAB_ROWS, 128), jnp.float32)
    for l in range(L):
        b = l * ROWS_PER_LAYER
        slab = slab.at[b + R_BO, :D].set(bo[l])
        slab = slab.at[b + R_LN1G, :D].set(ln1g[l])
        slab = slab.at[b + R_LN1B, :D].set(ln1b[l])
        slab = slab.at[b + R_B1, :DFF].set(b1[l])
        slab = slab.at[b + R_B2, :D].set(b2[l])
        slab = slab.at[b + R_LNFG, :D].set(lnfg[l])
        slab = slab.at[b + R_LNFB, :D].set(lnfb[l])
    slab = slab.at[R_BOUT, :F].set(bout[0])
    slab = slab.at[R_WOUT:R_WOUT + D, :F].set(wout)
    w_emb_aug = jnp.concatenate([w_emb, b_emb], axis=0)      # (2F+1, D): bias as last row
    slab = slab.at[R_WEMB:R_WEMB + 2 * F + 1, :D].set(w_emb_aug)

    bias = _attn_bias()
    return (bias, wproj, w1, w2, slab)


if __name__ == "__main__":
    key = jax.random.PRNGKey(0)
    kx, km, kp = jax.random.split(key, 3)
    X = jax.random.normal(kx, (B, T, F), dtype=jnp.float32)
    missing_mask = jax.random.bernoulli(km, 0.7, (B, T, F)).astype(jnp.float32)
    params = init_params(kp)
    kparams = pack_params(params)

    imputed = reformer_forward(X, missing_mask, kparams)
    imputed = jax.block_until_ready(imputed)

    ref = reference_forward(X, missing_mask, params)
    assert imputed.shape == (B, T, F) and imputed.dtype == jnp.float32
    # slightly relaxed tolerance: kernel uses rsqrt + approx EUP reciprocal
    assert jnp.allclose(imputed, ref, atol=5e-3, rtol=5e-3), "mismatch vs JAX reference"

    print("KERNEL_OK")
</pallas_src>

<mosaic_0001>
module attributes {stable_mosaic.version = 11 : i64} {
  func.func @_reformer_kernel(%arg0: memref<32x9xf32, #tpu.memory_space<vmem>>, %arg1: memref<64x64xf32, #tpu.memory_space<vmem>>, %arg2: memref<2x32x96xf32, #tpu.memory_space<vmem>>, %arg3: memref<2x32x64xf32, #tpu.memory_space<vmem>>, %arg4: memref<2x64x32xf32, #tpu.memory_space<vmem>>, %arg5: memref<64x128xf32, #tpu.memory_space<vmem>>, %arg6: memref<32x4xf32, #tpu.memory_space<vmem>>) attributes {dimension_semantics = [], scalar_prefetch = 0 : i64, scratch_operands = 0 : i64, tpu.core_type = #tpu.core_type<tc>} {
    %c0 = arith.constant 0 : index
    %c0_0 = arith.constant 0 : index
    %0 = vector.load %arg0[%c0, %c0_0] : memref<32x9xf32, #tpu.memory_space<vmem>>, vector<32x9xf32>
    %c0_1 = arith.constant 0 : index
    %c0_2 = arith.constant 0 : index
    %1 = vector.load %arg1[%c0_1, %c0_2] : memref<64x64xf32, #tpu.memory_space<vmem>>, vector<64x64xf32>
    %c48 = arith.constant 48 : index
    %c0_3 = arith.constant 0 : index
    %2 = vector.load %arg5[%c48, %c0_3] : memref<64x128xf32, #tpu.memory_space<vmem>>, vector<9x128xf32>
    %3 = vector.extract_strided_slice %2 {offsets = [0, 0], sizes = [9, 32], strides = [1, 1]} : vector<9x128xf32> to vector<9x32xf32>
    %cst = arith.constant dense<0.000000e+00> : vector<32x32xf32>
    %4 = tpu.matmul %0, %3, %cst {dimension_numbers = #tpu.dot_dimension_numbers<[1], [0], [0], [1], [0, 0, 1, 1], [], []>} : vector<32x9xf32>, vector<9x32xf32>, vector<32x32xf32> -> vector<32x32xf32>
    %c0_4 = arith.constant 0 : index
    %c0_5 = arith.constant 0 : index
    %c0_6 = arith.constant 0 : index
    %5 = vector.load %arg2[%c0_4, %c0_5, %c0_6] : memref<2x32x96xf32, #tpu.memory_space<vmem>>, vector<1x32x96xf32>
    %6 = vector.shape_cast %5 : vector<1x32x96xf32> to vector<32x96xf32>
    %cst_7 = arith.constant dense<0.000000e+00> : vector<32x96xf32>
    %7 = tpu.matmul %4, %6, %cst_7 {dimension_numbers = #tpu.dot_dimension_numbers<[1], [0], [0], [1], [0, 0, 1, 1], [], []>} : vector<32x32xf32>, vector<32x96xf32>, vector<32x96xf32> -> vector<32x96xf32>
    %8 = vector.extract_strided_slice %7 {offsets = [0, 0], sizes = [32, 16], strides = [1, 1]} : vector<32x96xf32> to vector<32x16xf32>
    %9 = vector.extract_strided_slice %7 {offsets = [0, 16], sizes = [32, 16], strides = [1, 1]} : vector<32x96xf32> to vector<32x16xf32>
    %10 = tpu.concatenate %8, %9 in 0 : vector<32x16xf32>, vector<32x16xf32> -> vector<64x16xf32>
    %11 = vector.extract_strided_slice %7 {offsets = [0, 32], sizes = [32, 32], strides = [1, 1]} : vector<32x96xf32> to vector<32x32xf32>
    %12 = vector.extract_strided_slice %7 {offsets = [0, 64], sizes = [32, 32], strides = [1, 1]} : vector<32x96xf32> to vector<32x32xf32>
    %13 = tpu.concatenate %11, %12 in 0 : vector<32x32xf32>, vector<32x32xf32> -> vector<64x32xf32>
    %14 = arith.mulf %10, %10 : vector<64x16xf32>
    %cst_8 = arith.constant dense<0.000000e+00> : vector<64xf32>
    %15 = vector.multi_reduction <add>, %14, %cst_8 [1] : vector<64x16xf32> to vector<64xf32>
    %16 = vector.shape_cast %15 : vector<64xf32> to vector<64x1xf32>
    %cst_9 = arith.constant 1.000000e-24 : f32
    %17 = vector.broadcast %cst_9 : f32 to vector<64x1xf32>
    %18 = arith.maximumf %16, %17 : vector<64x1xf32>
    %19 = math.rsqrt %18 : vector<64x1xf32>
    %20 = vector.broadcast %19 : vector<64x1xf32> to vector<64x16xf32>
    %21 = arith.mulf %10, %20 : vector<64x16xf32>
    %cst_10 = arith.constant dense<0.000000e+00> : vector<64x64xf32>
    %22 = tpu.matmul %10, %21, %cst_10 {dimension_numbers = #tpu.dot_dimension_numbers<[1], [1], [0], [0], [0, 0, 1, 0], [], []>} : vector<64x16xf32>, vector<64x16xf32>, vector<64x64xf32> -> vector<64x64xf32>
    %23 = arith.addf %22, %1 : vector<64x64xf32>
    %cst_11 = arith.constant dense<0xFF800000> : vector<64xf32>
    %24 = vector.multi_reduction <maximumf>, %23, %cst_11 [1] : vector<64x64xf32> to vector<64xf32>
    %25 = vector.shape_cast %24 : vector<64xf32> to vector<64x1xf32>
    %26 = vector.broadcast %25 : vector<64x1xf32> to vector<64x64xf32>
    %27 = arith.subf %23, %26 : vector<64x64xf32>
    %28 = math.exp %27 : vector<64x64xf32>
    %cst_12 = arith.constant dense<0.000000e+00> : vector<64xf32>
    %29 = vector.multi_reduction <add>, %28, %cst_12 [1] : vector<64x64xf32> to vector<64xf32>
    %30 = vector.shape_cast %29 : vector<64xf32> to vector<64x1xf32>
    %31 = tpu.reciprocal %30 {approx = true} : vector<64x1xf32> -> vector<64x1xf32>
    %32 = vector.broadcast %31 : vector<64x1xf32> to vector<64x64xf32>
    %33 = arith.mulf %28, %32 : vector<64x64xf32>
    %cst_13 = arith.constant dense<0.000000e+00> : vector<64x32xf32>
    %34 = tpu.matmul %33, %13, %cst_13 {dimension_numbers = #tpu.dot_dimension_numbers<[1], [0], [0], [1], [0, 0, 1, 1], [], []>} : vector<64x64xf32>, vector<64x32xf32>, vector<64x32xf32> -> vector<64x32xf32>
    %35 = vector.extract_strided_slice %34 {offsets = [0, 0], sizes = [32, 32], strides = [1, 1]} : vector<64x32xf32> to vector<32x32xf32>
    %36 = vector.extract_strided_slice %34 {offsets = [32, 0], sizes = [32, 32], strides = [1, 1]} : vector<64x32xf32> to vector<32x32xf32>
    %37 = arith.addf %35, %36 : vector<32x32xf32>
    %c0_14 = arith.constant 0 : index
    %c0_15 = arith.constant 0 : index
    %38 = vector.load %arg5[%c0_14, %c0_15] : memref<64x128xf32, #tpu.memory_space<vmem>>, vector<1x128xf32>
    %39 = vector.extract_strided_slice %38 {offsets = [0, 0], sizes = [1, 32], strides = [1, 1]} : vector<1x128xf32> to vector<1x32xf32>
    %40 = vector.broadcast %39 : vector<1x32xf32> to vector<32x32xf32>
    %41 = arith.addf %37, %40 : vector<32x32xf32>
    %42 = arith.addf %41, %4 : vector<32x32xf32>
    %c1 = arith.constant 1 : index
    %c0_16 = arith.constant 0 : index
    %43 = vector.load %arg5[%c1, %c0_16] : memref<64x128xf32, #tpu.memory_space<vmem>>, vector<1x128xf32>
    %44 = vector.extract_strided_slice %43 {offsets = [0, 0], sizes = [1, 32], strides = [1, 1]} : vector<1x128xf32> to vector<1x32xf32>
    %c2 = arith.constant 2 : index
    %c0_17 = arith.constant 0 : index
    %45 = vector.load %arg5[%c2, %c0_17] : memref<64x128xf32, #tpu.memory_space<vmem>>, vector<1x128xf32>
    %46 = vector.extract_strided_slice %45 {offsets = [0, 0], sizes = [1, 32], strides = [1, 1]} : vector<1x128xf32> to vector<1x32xf32>
    %cst_18 = arith.constant dense<0.000000e+00> : vector<32xf32>
    %47 = vector.multi_reduction <add>, %42, %cst_18 [1] : vector<32x32xf32> to vector<32xf32>
    %48 = vector.shape_cast %47 : vector<32xf32> to vector<32x1xf32>
    %cst_19 = arith.constant 3.200000e+01 : f32
    %49 = vector.broadcast %cst_19 : f32 to vector<32x1xf32>
    %50 = arith.divf %48, %49 : vector<32x1xf32>
    %51 = vector.broadcast %50 : vector<32x1xf32> to vector<32x32xf32>
    %52 = arith.subf %42, %51 : vector<32x32xf32>
    %53 = arith.mulf %52, %52 : vector<32x32xf32>
    %cst_20 = arith.constant dense<0.000000e+00> : vector<32xf32>
    %54 = vector.multi_reduction <add>, %53, %cst_20 [1] : vector<32x32xf32> to vector<32xf32>
    %55 = vector.shape_cast %54 : vector<32xf32> to vector<32x1xf32>
    %cst_21 = arith.constant 3.200000e+01 : f32
    %56 = vector.broadcast %cst_21 : f32 to vector<32x1xf32>
    %57 = arith.divf %55, %56 : vector<32x1xf32>
    %58 = vector.broadcast %50 : vector<32x1xf32> to vector<32x32xf32>
    %59 = arith.subf %42, %58 : vector<32x32xf32>
    %cst_22 = arith.constant 9.99999974E-6 : f32
    %60 = vector.broadcast %cst_22 : f32 to vector<32x1xf32>
    %61 = arith.addf %57, %60 : vector<32x1xf32>
    %62 = math.rsqrt %61 : vector<32x1xf32>
    %63 = vector.broadcast %62 : vector<32x1xf32> to vector<32x32xf32>
    %64 = arith.mulf %59, %63 : vector<32x32xf32>
    %65 = vector.broadcast %44 : vector<1x32xf32> to vector<32x32xf32>
    %66 = arith.mulf %64, %65 : vector<32x32xf32>
    %67 = vector.broadcast %46 : vector<1x32xf32> to vector<32x32xf32>
    %68 = arith.addf %66, %67 : vector<32x32xf32>
    %c5 = arith.constant 5 : index
    %c0_23 = arith.constant 0 : index
    %69 = vector.load %arg5[%c5, %c0_23] : memref<64x128xf32, #tpu.memory_space<vmem>>, vector<1x128xf32>
    %70 = vector.extract_strided_slice %69 {offsets = [0, 0], sizes = [1, 32], strides = [1, 1]} : vector<1x128xf32> to vector<1x32xf32>
    %c6 = arith.constant 6 : index
    %c0_24 = arith.constant 0 : index
    %71 = vector.load %arg5[%c6, %c0_24] : memref<64x128xf32, #tpu.memory_space<vmem>>, vector<1x128xf32>
    %72 = vector.extract_strided_slice %71 {offsets = [0, 0], sizes = [1, 32], strides = [1, 1]} : vector<1x128xf32> to vector<1x32xf32>
    %cst_25 = arith.constant dense<0.000000e+00> : vector<32xf32>
    %73 = vector.multi_reduction <add>, %68, %cst_25 [1] : vector<32x32xf32> to vector<32xf32>
    %74 = vector.shape_cast %73 : vector<32xf32> to vector<32x1xf32>
    %cst_26 = arith.constant 3.200000e+01 : f32
    %75 = vector.broadcast %cst_26 : f32 to vector<32x1xf32>
    %76 = arith.divf %74, %75 : vector<32x1xf32>
    %77 = vector.broadcast %76 : vector<32x1xf32> to vector<32x32xf32>
    %78 = arith.subf %68, %77 : vector<32x32xf32>
    %79 = arith.mulf %78, %78 : vector<32x32xf32>
    %cst_27 = arith.constant dense<0.000000e+00> : vector<32xf32>
    %80 = vector.multi_reduction <add>, %79, %cst_27 [1] : vector<32x32xf32> to vector<32xf32>
    %81 = vector.shape_cast %80 : vector<32xf32> to vector<32x1xf32>
    %cst_28 = arith.constant 3.200000e+01 : f32
    %82 = vector.broadcast %cst_28 : f32 to vector<32x1xf32>
    %83 = arith.divf %81, %82 : vector<32x1xf32>
    %84 = vector.broadcast %76 : vector<32x1xf32> to vector<32x32xf32>
    %85 = arith.subf %68, %84 : vector<32x32xf32>
    %cst_29 = arith.constant 9.99999997E-7 : f32
    %86 = vector.broadcast %cst_29 : f32 to vector<32x1xf32>
    %87 = arith.addf %83, %86 : vector<32x1xf32>
    %88 = math.rsqrt %87 : vector<32x1xf32>
    %89 = vector.broadcast %88 : vector<32x1xf32> to vector<32x32xf32>
    %90 = arith.mulf %85, %89 : vector<32x32xf32>
    %91 = vector.broadcast %70 : vector<1x32xf32> to vector<32x32xf32>
    %92 = arith.mulf %90, %91 : vector<32x32xf32>
    %93 = vector.broadcast %72 : vector<1x32xf32> to vector<32x32xf32>
    %94 = arith.addf %92, %93 : vector<32x32xf32>
    %c0_30 = arith.constant 0 : index
    %c0_31 = arith.constant 0 : index
    %c0_32 = arith.constant 0 : index
    %95 = vector.load %arg3[%c0_30, %c0_31, %c0_32] : memref<2x32x64xf32, #tpu.memory_space<vmem>>, vector<1x32x64xf32>
    %96 = vector.shape_cast %95 : vector<1x32x64xf32> to vector<32x64xf32>
    %cst_33 = arith.constant dense<0.000000e+00> : vector<32x64xf32>
    %97 = tpu.matmul %94, %96, %cst_33 {dimension_numbers = #tpu.dot_dimension_numbers<[1], [0], [0], [1], [0, 0, 1, 1], [], []>} : vector<32x32xf32>, vector<32x64xf32>, vector<32x64xf32> -> vector<32x64xf32>
    %c3 = arith.constant 3 : index
    %c0_34 = arith.constant 0 : index
    %98 = vector.load %arg5[%c3, %c0_34] : memref<64x128xf32, #tpu.memory_space<vmem>>, vector<1x128xf32>
    %99 = vector.extract_strided_slice %98 {offsets = [0, 0], sizes = [1, 64], strides = [1, 1]} : vector<1x128xf32> to vector<1x64xf32>
    %100 = vector.broadcast %99 : vector<1x64xf32> to vector<32x64xf32>
    %101 = arith.addf %97, %100 : vector<32x64xf32>
    %cst_35 = arith.constant 0.000000e+00 : f32
    %102 = vector.broadcast %cst_35 : f32 to vector<32x64xf32>
    %103 = arith.maximumf %101, %102 : vector<32x64xf32>
    %c0_36 = arith.constant 0 : index
    %c0_37 = arith.constant 0 : index
    %c0_38 = arith.constant 0 : index
    %104 = vector.load %arg4[%c0_36, %c0_37, %c0_38] : memref<2x64x32xf32, #tpu.memory_space<vmem>>, vector<1x64x32xf32>
    %105 = vector.shape_cast %104 : vector<1x64x32xf32> to vector<64x32xf32>
    %cst_39 = arith.constant dense<0.000000e+00> : vector<32x32xf32>
    %106 = tpu.matmul %103, %105, %cst_39 {dimension_numbers = #tpu.dot_dimension_numbers<[1], [0], [0], [1], [0, 0, 1, 1], [], []>} : vector<32x64xf32>, vector<64x32xf32>, vector<32x32xf32> -> vector<32x32xf32>
    %c4 = arith.constant 4 : index
    %c0_40 = arith.constant 0 : index
    %107 = vector.load %arg5[%c4, %c0_40] : memref<64x128xf32, #tpu.memory_space<vmem>>, vector<1x128xf32>
    %108 = vector.extract_strided_slice %107 {offsets = [0, 0], sizes = [1, 32], strides = [1, 1]} : vector<1x128xf32> to vector<1x32xf32>
    %109 = vector.broadcast %108 : vector<1x32xf32> to vector<32x32xf32>
    %110 = arith.addf %106, %109 : vector<32x32xf32>
    %111 = arith.addf %110, %68 : vector<32x32xf32>
    %c1_41 = arith.constant 1 : index
    %c0_42 = arith.constant 0 : index
    %c0_43 = arith.constant 0 : index
    %112 = vector.load %arg2[%c1_41, %c0_42, %c0_43] : memref<2x32x96xf32, #tpu.memory_space<vmem>>, vector<1x32x96xf32>
    %113 = vector.shape_cast %112 : vector<1x32x96xf32> to vector<32x96xf32>
    %cst_44 = arith.constant dense<0.000000e+00> : vector<32x96xf32>
    %114 = tpu.matmul %111, %113, %cst_44 {dimension_numbers = #tpu.dot_dimension_numbers<[1], [0], [0], [1], [0, 0, 1, 1], [], []>} : vector<32x32xf32>, vector<32x96xf32>, vector<32x96xf32> -> vector<32x96xf32>
    %115 = vector.extract_strided_slice %114 {offsets = [0, 0], sizes = [32, 16], strides = [1, 1]} : vector<32x96xf32> to vector<32x16xf32>
    %116 = vector.extract_strided_slice %114 {offsets = [0, 16], sizes = [32, 16], strides = [1, 1]} : vector<32x96xf32> to vector<32x16xf32>
    %117 = tpu.concatenate %115, %116 in 0 : vector<32x16xf32>, vector<32x16xf32> -> vector<64x16xf32>
    %118 = vector.extract_strided_slice %114 {offsets = [0, 32], sizes = [32, 32], strides = [1, 1]} : vector<32x96xf32> to vector<32x32xf32>
    %119 = vector.extract_strided_slice %114 {offsets = [0, 64], sizes = [32, 32], strides = [1, 1]} : vector<32x96xf32> to vector<32x32xf32>
    %120 = tpu.concatenate %118, %119 in 0 : vector<32x32xf32>, vector<32x32xf32> -> vector<64x32xf32>
    %121 = arith.mulf %117, %117 : vector<64x16xf32>
    %cst_45 = arith.constant dense<0.000000e+00> : vector<64xf32>
    %122 = vector.multi_reduction <add>, %121, %cst_45 [1] : vector<64x16xf32> to vector<64xf32>
    %123 = vector.shape_cast %122 : vector<64xf32> to vector<64x1xf32>
    %cst_46 = arith.constant 1.000000e-24 : f32
    %124 = vector.broadcast %cst_46 : f32 to vector<64x1xf32>
    %125 = arith.maximumf %123, %124 : vector<64x1xf32>
    %126 = math.rsqrt %125 : vector<64x1xf32>
    %127 = vector.broadcast %126 : vector<64x1xf32> to vector<64x16xf32>
    %128 = arith.mulf %117, %127 : vector<64x16xf32>
    %cst_47 = arith.constant dense<0.000000e+00> : vector<64x64xf32>
    %129 = tpu.matmul %117, %128, %cst_47 {dimension_numbers = #tpu.dot_dimension_numbers<[1], [1], [0], [0], [0, 0, 1, 0], [], []>} : vector<64x16xf32>, vector<64x16xf32>, vector<64x64xf32> -> vector<64x64xf32>
    %130 = arith.addf %129, %1 : vector<64x64xf32>
    %cst_48 = arith.constant dense<0xFF800000> : vector<64xf32>
    %131 = vector.multi_reduction <maximumf>, %130, %cst_48 [1] : vector<64x64xf32> to vector<64xf32>
    %132 = vector.shape_cast %131 : vector<64xf32> to vector<64x1xf32>
    %133 = vector.broadcast %132 : vector<64x1xf32> to vector<64x64xf32>
    %134 = arith.subf %130, %133 : vector<64x64xf32>
    %135 = math.exp %134 : vector<64x64xf32>
    %cst_49 = arith.constant dense<0.000000e+00> : vector<64xf32>
    %136 = vector.multi_reduction <add>, %135, %cst_49 [1] : vector<64x64xf32> to vector<64xf32>
    %137 = vector.shape_cast %136 : vector<64xf32> to vector<64x1xf32>
    %138 = tpu.reciprocal %137 {approx = true} : vector<64x1xf32> -> vector<64x1xf32>
    %139 = vector.broadcast %138 : vector<64x1xf32> to vector<64x64xf32>
    %140 = arith.mulf %135, %139 : vector<64x64xf32>
    %cst_50 = arith.constant dense<0.000000e+00> : vector<64x32xf32>
    %141 = tpu.matmul %140, %120, %cst_50 {dimension_numbers = #tpu.dot_dimension_numbers<[1], [0], [0], [1], [0, 0, 1, 1], [], []>} : vector<64x64xf32>, vector<64x32xf32>, vector<64x32xf32> -> vector<64x32xf32>
    %142 = vector.extract_strided_slice %141 {offsets = [0, 0], sizes = [32, 32], strides = [1, 1]} : vector<64x32xf32> to vector<32x32xf32>
    %143 = vector.extract_strided_slice %141 {offsets = [32, 0], sizes = [32, 32], strides = [1, 1]} : vector<64x32xf32> to vector<32x32xf32>
    %144 = arith.addf %142, %143 : vector<32x32xf32>
    %c7 = arith.constant 7 : index
    %c0_51 = arith.constant 0 : index
    %145 = vector.load %arg5[%c7, %c0_51] : memref<64x128xf32, #tpu.memory_space<vmem>>, vector<1x128xf32>
    %146 = vector.extract_strided_slice %145 {offsets = [0, 0], sizes = [1, 32], strides = [1, 1]} : vector<1x128xf32> to vector<1x32xf32>
    %147 = vector.broadcast %146 : vector<1x32xf32> to vector<32x32xf32>
    %148 = arith.addf %144, %147 : vector<32x32xf32>
    %149 = arith.addf %148, %111 : vector<32x32xf32>
    %c8 = arith.constant 8 : index
    %c0_52 = arith.constant 0 : index
    %150 = vector.load %arg5[%c8, %c0_52] : memref<64x128xf32, #tpu.memory_space<vmem>>, vector<1x128xf32>
    %151 = vector.extract_strided_slice %150 {offsets = [0, 0], sizes = [1, 32], strides = [1, 1]} : vector<1x128xf32> to vector<1x32xf32>
    %c9 = arith.constant 9 : index
    %c0_53 = arith.constant 0 : index
    %152 = vector.load %arg5[%c9, %c0_53] : memref<64x128xf32, #tpu.memory_space<vmem>>, vector<1x128xf32>
    %153 = vector.extract_strided_slice %152 {offsets = [0, 0], sizes = [1, 32], strides = [1, 1]} : vector<1x128xf32> to vector<1x32xf32>
    %cst_54 = arith.constant dense<0.000000e+00> : vector<32xf32>
    %154 = vector.multi_reduction <add>, %149, %cst_54 [1] : vector<32x32xf32> to vector<32xf32>
    %155 = vector.shape_cast %154 : vector<32xf32> to vector<32x1xf32>
    %cst_55 = arith.constant 3.200000e+01 : f32
    %156 = vector.broadcast %cst_55 : f32 to vector<32x1xf32>
    %157 = arith.divf %155, %156 : vector<32x1xf32>
    %158 = vector.broadcast %157 : vector<32x1xf32> to vector<32x32xf32>
    %159 = arith.subf %149, %158 : vector<32x32xf32>
    %160 = arith.mulf %159, %159 : vector<32x32xf32>
    %cst_56 = arith.constant dense<0.000000e+00> : vector<32xf32>
    %161 = vector.multi_reduction <add>, %160, %cst_56 [1] : vector<32x32xf32> to vector<32xf32>
    %162 = vector.shape_cast %161 : vector<32xf32> to vector<32x1xf32>
    %cst_57 = arith.constant 3.200000e+01 : f32
    %163 = vector.broadcast %cst_57 : f32 to vector<32x1xf32>
    %164 = arith.divf %162, %163 : vector<32x1xf32>
    %165 = vector.broadcast %157 : vector<32x1xf32> to vector<32x32xf32>
    %166 = arith.subf %149, %165 : vector<32x32xf32>
    %cst_58 = arith.constant 9.99999974E-6 : f32
    %167 = vector.broadcast %cst_58 : f32 to vector<32x1xf32>
    %168 = arith.addf %164, %167 : vector<32x1xf32>
    %169 = math.rsqrt %168 : vector<32x1xf32>
    %170 = vector.broadcast %169 : vector<32x1xf32> to vector<32x32xf32>
    %171 = arith.mulf %166, %170 : vector<32x32xf32>
    %172 = vector.broadcast %151 : vector<1x32xf32> to vector<32x32xf32>
    %173 = arith.mulf %171, %172 : vector<32x32xf32>
    %174 = vector.broadcast %153 : vector<1x32xf32> to vector<32x32xf32>
    %175 = arith.addf %173, %174 : vector<32x32xf32>
    %c12 = arith.constant 12 : index
    %c0_59 = arith.constant 0 : index
    %176 = vector.load %arg5[%c12, %c0_59] : memref<64x128xf32, #tpu.memory_space<vmem>>, vector<1x128xf32>
    %177 = vector.extract_strided_slice %176 {offsets = [0, 0], sizes = [1, 32], strides = [1, 1]} : vector<1x128xf32> to vector<1x32xf32>
    %c13 = arith.constant 13 : index
    %c0_60 = arith.constant 0 : index
    %178 = vector.load %arg5[%c13, %c0_60] : memref<64x128xf32, #tpu.memory_space<vmem>>, vector<1x128xf32>
    %179 = vector.extract_strided_slice %178 {offsets = [0, 0], sizes = [1, 32], strides = [1, 1]} : vector<1x128xf32> to vector<1x32xf32>
    %cst_61 = arith.constant dense<0.000000e+00> : vector<32xf32>
    %180 = vector.multi_reduction <add>, %175, %cst_61 [1] : vector<32x32xf32> to vector<32xf32>
    %181 = vector.shape_cast %180 : vector<32xf32> to vector<32x1xf32>
    %cst_62 = arith.constant 3.200000e+01 : f32
    %182 = vector.broadcast %cst_62 : f32 to vector<32x1xf32>
    %183 = arith.divf %181, %182 : vector<32x1xf32>
    %184 = vector.broadcast %183 : vector<32x1xf32> to vector<32x32xf32>
    %185 = arith.subf %175, %184 : vector<32x32xf32>
    %186 = arith.mulf %185, %185 : vector<32x32xf32>
    %cst_63 = arith.constant dense<0.000000e+00> : vector<32xf32>
    %187 = vector.multi_reduction <add>, %186, %cst_63 [1] : vector<32x32xf32> to vector<32xf32>
    %188 = vector.shape_cast %187 : vector<32xf32> to vector<32x1xf32>
    %cst_64 = arith.constant 3.200000e+01 : f32
    %189 = vector.broadcast %cst_64 : f32 to vector<32x1xf32>
    %190 = arith.divf %188, %189 : vector<32x1xf32>
    %191 = vector.broadcast %183 : vector<32x1xf32> to vector<32x32xf32>
    %192 = arith.subf %175, %191 : vector<32x32xf32>
    %cst_65 = arith.constant 9.99999997E-7 : f32
    %193 = vector.broadcast %cst_65 : f32 to vector<32x1xf32>
    %194 = arith.addf %190, %193 : vector<32x1xf32>
    %195 = math.rsqrt %194 : vector<32x1xf32>
    %196 = vector.broadcast %195 : vector<32x1xf32> to vector<32x32xf32>
    %197 = arith.mulf %192, %196 : vector<32x32xf32>
    %198 = vector.broadcast %177 : vector<1x32xf32> to vector<32x32xf32>
    %199 = arith.mulf %197, %198 : vector<32x32xf32>
    %200 = vector.broadcast %179 : vector<1x32xf32> to vector<32x32xf32>
    %201 = arith.addf %199, %200 : vector<32x32xf32>
    %c1_66 = arith.constant 1 : index
    %c0_67 = arith.constant 0 : index
    %c0_68 = arith.constant 0 : index
    %202 = vector.load %arg3[%c1_66, %c0_67, %c0_68] : memref<2x32x64xf32, #tpu.memory_space<vmem>>, vector<1x32x64xf32>
    %203 = vector.shape_cast %202 : vector<1x32x64xf32> to vector<32x64xf32>
    %cst_69 = arith.constant dense<0.000000e+00> : vector<32x64xf32>
    %204 = tpu.matmul %201, %203, %cst_69 {dimension_numbers = #tpu.dot_dimension_numbers<[1], [0], [0], [1], [0, 0, 1, 1], [], []>} : vector<32x32xf32>, vector<32x64xf32>, vector<32x64xf32> -> vector<32x64xf32>
    %c10 = arith.constant 10 : index
    %c0_70 = arith.constant 0 : index
    %205 = vector.load %arg5[%c10, %c0_70] : memref<64x128xf32, #tpu.memory_space<vmem>>, vector<1x128xf32>
    %206 = vector.extract_strided_slice %205 {offsets = [0, 0], sizes = [1, 64], strides = [1, 1]} : vector<1x128xf32> to vector<1x64xf32>
    %207 = vector.broadcast %206 : vector<1x64xf32> to vector<32x64xf32>
    %208 = arith.addf %204, %207 : vector<32x64xf32>
    %cst_71 = arith.constant 0.000000e+00 : f32
    %209 = vector.broadcast %cst_71 : f32 to vector<32x64xf32>
    %210 = arith.maximumf %208, %209 : vector<32x64xf32>
    %c1_72 = arith.constant 1 : index
    %c0_73 = arith.constant 0 : index
    %c0_74 = arith.constant 0 : index
    %211 = vector.load %arg4[%c1_72, %c0_73, %c0_74] : memref<2x64x32xf32, #tpu.memory_space<vmem>>, vector<1x64x32xf32>
    %212 = vector.shape_cast %211 : vector<1x64x32xf32> to vector<64x32xf32>
    %cst_75 = arith.constant dense<0.000000e+00> : vector<32x32xf32>
    %213 = tpu.matmul %210, %212, %cst_75 {dimension_numbers = #tpu.dot_dimension_numbers<[1], [0], [0], [1], [0, 0, 1, 1], [], []>} : vector<32x64xf32>, vector<64x32xf32>, vector<32x32xf32> -> vector<32x32xf32>
    %c11 = arith.constant 11 : index
    %c0_76 = arith.constant 0 : index
    %214 = vector.load %arg5[%c11, %c0_76] : memref<64x128xf32, #tpu.memory_space<vmem>>, vector<1x128xf32>
    %215 = vector.extract_strided_slice %214 {offsets = [0, 0], sizes = [1, 32], strides = [1, 1]} : vector<1x128xf32> to vector<1x32xf32>
    %216 = vector.broadcast %215 : vector<1x32xf32> to vector<32x32xf32>
    %217 = arith.addf %213, %216 : vector<32x32xf32>
    %218 = arith.addf %217, %175 : vector<32x32xf32>
    %c16 = arith.constant 16 : index
    %c0_77 = arith.constant 0 : index
    %219 = vector.load %arg5[%c16, %c0_77] : memref<64x128xf32, #tpu.memory_space<vmem>>, vector<32x128xf32>
    %220 = vector.extract_strided_slice %219 {offsets = [0, 0], sizes = [32, 4], strides = [1, 1]} : vector<32x128xf32> to vector<32x4xf32>
    %cst_78 = arith.constant dense<0.000000e+00> : vector<32x4xf32>
    %221 = tpu.matmul %218, %220, %cst_78 {dimension_numbers = #tpu.dot_dimension_numbers<[1], [0], [0], [1], [0, 0, 1, 1], [], []>} : vector<32x32xf32>, vector<32x4xf32>, vector<32x4xf32> -> vector<32x4xf32>
    %c14 = arith.constant 14 : index
    %c0_79 = arith.constant 0 : index
    %222 = vector.load %arg5[%c14, %c0_79] : memref<64x128xf32, #tpu.memory_space<vmem>>, vector<1x128xf32>
    %223 = vector.extract_strided_slice %222 {offsets = [0, 0], sizes = [1, 4], strides = [1, 1]} : vector<1x128xf32> to vector<1x4xf32>
    %224 = vector.broadcast %223 : vector<1x4xf32> to vector<32x4xf32>
    %225 = arith.addf %221, %224 : vector<32x4xf32>
    %226 = vector.extract_strided_slice %0 {offsets = [0, 0], sizes = [32, 4], strides = [1, 1]} : vector<32x9xf32> to vector<32x4xf32>
    %227 = vector.extract_strided_slice %0 {offsets = [0, 4], sizes = [32, 4], strides = [1, 1]} : vector<32x9xf32> to vector<32x4xf32>
    %228 = arith.mulf %227, %226 : vector<32x4xf32>
    %cst_80 = arith.constant 1.000000e+00 : f32
    %229 = vector.broadcast %cst_80 : f32 to vector<32x4xf32>
    %230 = arith.subf %229, %227 : vector<32x4xf32>
    %231 = arith.mulf %230, %225 : vector<32x4xf32>
    %232 = arith.addf %228, %231 : vector<32x4xf32>
    %c0_81 = arith.constant 0 : index
    %c0_82 = arith.constant 0 : index
    %233 = vector.load %arg6[%c0_81, %c0_82] : memref<32x4xf32, #tpu.memory_space<vmem>>, vector<32x4xf32>
    tpu.vector_store %arg6[%c0_81, %c0_82], %232 {strides = array<i32>} : memref<32x4xf32, #tpu.memory_space<vmem>>, vector<32x4xf32>,
    return
  }
}

</mosaic_0001>

<llo_original>
// kernel: reformer_forward.1
$region0: #{reformer_forward.1}
  #allocation0 [shape = 'u32[]', space=smem, size = 0x4, offset = 0x4, fixed_abs, tag = 'smem constant byte address 0x4 - core index']
  #allocation1 [shape = 'u32[72,128]{1,0:T(1,128)}', space=vmem, size = 0x9000, scoped, tag = 'internal scratch']
  %s0 = inlined_call_operand.vmem [shape: f32[32,9], index: 0, kind: input, shape index: {}]
  %s1 = inlined_call_operand.vmem [shape: f32[64,64], index: 1, kind: input, shape index: {}]
  %s2 = inlined_call_operand.vmem [shape: f32[2,32,96], index: 2, kind: input, shape index: {}]
  %s3 = inlined_call_operand.vmem [shape: f32[2,32,64], index: 3, kind: input, shape index: {}]
  %s4 = inlined_call_operand.vmem [shape: f32[2,64,32], index: 4, kind: input, shape index: {}]
  %s5 = inlined_call_operand.hbm [shape: f32[64,128], index: 5, kind: input, shape index: {}]
  %s6 = inlined_call_operand.vmem [shape: f32[32,4], index: 6, kind: output, shape index: {}]
  %s7 = sld [smem:[#allocation0]]
  $region38: #{reformer_forward.1} parent=0
    _
  %s9 = ssub.s32 1, %s7
  %s10 = scalar_select 0, %s9, %s7
  $region1: #{reformer_forward.1} parent=0
    #allocation2 [shape = 'u8[32768]{0}', space=vmem, size = 0x8000, scoped, tag = 'input window, operand 5, single buffered']
    #allocation3 [shape = 's32[1]{0}', space=sflag, size = 0x4, scoped, tag = 'scoped memory for reformer_forward.1']
    %11 = vsyncpa [#allocation3], 0
    // Predicated region
    $region2: #{reformer_forward.1} parent=1 // pred_check
      _
    $region3: #{reformer_forward.1} parent=1 // pred_check_branch
      %13 = sbr.rel (0) target = $region5
    $region4: #{reformer_forward.1} parent=1 // pred_region
      _
    $region5: #{reformer_forward.1} parent=1 // pred_fallthru
      _
    // Predicated region
    $region6: #{reformer_forward.1} parent=1 // pred_check
      _
    $region7: #{reformer_forward.1} parent=1 // pred_check_branch
      %15 = sbr.rel (0) target = $region9
    $region8: #{reformer_forward.1} parent=1 // pred_region
      _
    $region9: #{reformer_forward.1} parent=1 // pred_fallthru
      _
    // Predicated region
    $region10: #{reformer_forward.1} parent=1 // pred_check
      _
    $region11: #{reformer_forward.1} parent=1 // pred_check_branch
      %17 = sbr.rel (0) target = $region13
    $region12: #{reformer_forward.1} parent=1 // pred_region
      _
    $region13: #{reformer_forward.1} parent=1 // pred_fallthru
      _
    // Predicated region
    $region14: #{reformer_forward.1} parent=1 // pred_check
      _
    $region15: #{reformer_forward.1} parent=1 // pred_check_branch
      %19 = sbr.rel (0) target = $region17
    $region16: #{reformer_forward.1} parent=1 // pred_region
      _
    $region17: #{reformer_forward.1} parent=1 // pred_fallthru
      _
    // Predicated region
    $region18: #{reformer_forward.1} parent=1 // pred_check
      _
    $region19: #{reformer_forward.1} parent=1 // pred_check_branch
      %21 = sbr.rel (0) target = $region21
    $region20: #{reformer_forward.1} parent=1 // pred_region
      _
    $region21: #{reformer_forward.1} parent=1 // pred_fallthru
      _
    // Predicated region
    $region22: #{reformer_forward.1} parent=1 // pred_check
      _
    $region23: #{reformer_forward.1} parent=1 // pred_check_branch
      %23 = sbr.rel (0) target = $region25
    $region24: #{reformer_forward.1} parent=1 // pred_region
      %25 = vsyncadd [#allocation3], 0
      %s26 = sshll.u32 %s5, 4
      %s27 = int_to_ptr.hbm [resolvable:$true] %s26
      %s28 = sshll.u32 [#allocation2], 4
      %s29 = int_to_ptr.vmem [resolvable:$true] %s28
      %34 = dma.hbm_to_vmem [thread:$0]  %s27, 1024, %s29, [#allocation3], 128, 128, 8
    $region25: #{reformer_forward.1} parent=1 // pred_fallthru
      _
    // Predicated region
    $region26: #{reformer_forward.1} parent=1 // pred_check
      _
    $region27: #{reformer_forward.1} parent=1 // pred_check_branch
      %36 = sbr.rel (0) target = $region29
    $region28: #{reformer_forward.1} parent=1 // pred_region
      %38 = dma.done [#allocation3], 1024
    $region29: #{reformer_forward.1} parent=1 // pred_fallthru
      _
    %v39 = vld [vmem:[%s0] sm:$0xff]
    %v40 = vld [vmem:[%s0 + $0x8] sm:$0xff]
    %v41 = vld [vmem:[%s0 + $0x10] sm:$0xff]
    %v42 = vld [vmem:[%s0 + $0x18] sm:$0xff]
    %v43 = vld [vmem:[%s1] sm:$0xff]
    %v44 = vld [vmem:[%s1 + $0x8] sm:$0xff]
    %v45 = vld [vmem:[%s1 + $0x10] sm:$0xff]
    %v46 = vld [vmem:[%s1 + $0x18] sm:$0xff]
    %v47 = vld [vmem:[%s1 + $0x20] sm:$0xff]
    %v48 = vld [vmem:[%s1 + $0x28] sm:$0xff]
    %v49 = vld [vmem:[%s1 + $0x30] sm:$0xff]
    %v50 = vld [vmem:[%s1 + $0x38] sm:$0xff]
    %v51 = vld [vmem:[#allocation2 + $0x30] sm:$0xff]
    %v52 = vld [vmem:[#allocation2 + $0x38] sm:$0x1]
    %vm53 = vcmask 72704
    %v55 = vsel %vm53, %v39, 0
    %v58 = vsel %vm53, %v40, 0
    %v61 = vsel %vm53, %v41, 0
    %v64 = vsel %vm53, %v42, 0
    %vm66 = vcmask 1040384
    %v68 = vsel %vm66, %v52, 0
    %70 = vmatpush.msra.mxu0 0.0
    %71 = vmatpush.msra.mxu0 0.0
    %72 = vmatpush.msra.mxu0 0.0
    %73 = vmatpush.msra.mxu0 0.0
    %74 = vmatpush.msra.mxu0 0.0
    %75 = vmatpush.msra.mxu0 0.0
    %76 = vmatpush.msra.mxu0 0.0
    %77 = vmatpush.msra.mxu0 0.0
    %78 = vmatpush.msra.mxu0 0.0
    %79 = vmatpush.msra.mxu0 0.0
    %80 = vmatpush.msra.mxu0 0.0
    %81 = vmatpush.msra.mxu0 0.0
    %82 = vmatpush.msra.mxu0 0.0
    %83 = vmatpush.msra.mxu0 0.0
    %84 = vmatpush.msra.mxu0 %v68
    %85 = vmatpush.msra.mxu0 %v51
    %86 = vmatmul.f32.gmra.mxu0 %v55
    %v87 = vpop.f32.mrf.mxu0
    %v88 = vadd.f32 0.0, %v87
    %89 = vmatmul.f32.gmra.mxu0 %v58
    %v90 = vpop.f32.mrf.mxu0
    %v91 = vadd.f32 0.0, %v90
    %92 = vmatmul.f32.gmra.mxu0 %v61
    %v93 = vpop.f32.mrf.mxu0
    %v94 = vadd.f32 0.0, %v93
    %95 = vmatmul.f32.gmra.mxu0 %v64
    %v96 = vpop.f32.mrf.mxu0
    %v97 = vadd.f32 0.0, %v96
    %98 = vdwg.mxu0
    %v99 = vld [vmem:[%s2] sm:$0xff]
    %v100 = vld [vmem:[%s2 + $0x8] sm:$0xff]
    %v101 = vld [vmem:[%s2 + $0x10] sm:$0xff]
    %v102 = vld [vmem:[%s2 + $0x18] sm:$0xff]
    %vm103 = vcmask 261120
    %v105 = vsel %vm103, %v88, 0
    %v108 = vsel %vm103, %v91, 0
    %v111 = vsel %vm103, %v94, 0
    %v114 = vsel %vm103, %v97, 0
    %116 = vmatpush.msra.mxu0 0.0
    %117 = vmatpush.msra.mxu0 0.0
    %118 = vmatpush.msra.mxu0 0.0
    %119 = vmatpush.msra.mxu0 0.0
    %120 = vmatpush.msra.mxu0 0.0
    %121 = vmatpush.msra.mxu0 0.0
    %122 = vmatpush.msra.mxu0 0.0
    %123 = vmatpush.msra.mxu0 0.0
    %124 = vmatpush.msra.mxu0 0.0
    %125 = vmatpush.msra.mxu0 0.0
    %126 = vmatpush.msra.mxu0 0.0
    %127 = vmatpush.msra.mxu0 0.0
    %128 = vmatpush.msra.mxu0 %v102
    %129 = vmatpush.msra.mxu0 %v101
    %130 = vmatpush.msra.mxu0 %v100
    %131 = vmatpush.msra.mxu0 %v99
    %132 = vmatmul.f32.gmra.mxu0 %v105
    %v133 = vpop.f32.mrf.mxu0
    %v134 = vadd.f32 0.0, %v133
    %135 = vmatmul.f32.gmra.mxu0 %v108
    %v136 = vpop.f32.mrf.mxu0
    %v137 = vadd.f32 0.0, %v136
    %138 = vmatmul.f32.gmra.mxu0 %v111
    %v139 = vpop.f32.mrf.mxu0
    %v140 = vadd.f32 0.0, %v139
    %141 = vmatmul.f32.gmra.mxu0 %v114
    %v142 = vpop.f32.mrf.mxu0
    %v143 = vadd.f32 0.0, %v142
    %144 = vdwg.mxu0
    %149 = vrot.lane.b32.xlu0 %v134, 112
    %v150 = vpop.permute.xlu0 %149
    %151 = vrot.lane.b32.xlu0 %v137, 112
    %v152 = vpop.permute.xlu0 %151
    %153 = vrot.lane.b32.xlu0 %v140, 112
    %v154 = vpop.permute.xlu0 %153
    %155 = vrot.lane.b32.xlu0 %v143, 112
    %v156 = vpop.permute.xlu0 %155
    %161 = vrot.lane.b32.xlu0 %v134, 96
    %v162 = vpop.permute.xlu0 %161
    %163 = vrot.lane.b32.xlu0 %v137, 96
    %v164 = vpop.permute.xlu0 %163
    %165 = vrot.lane.b32.xlu0 %v140, 96
    %v166 = vpop.permute.xlu0 %165
    %167 = vrot.lane.b32.xlu0 %v143, 96
    %v168 = vpop.permute.xlu0 %167
    %v169 = vmul.f32 %v134, %v134
    %v170 = vmul.f32 %v137, %v137
    %v171 = vmul.f32 %v140, %v140
    %v172 = vmul.f32 %v143, %v143
    %v173 = vmul.f32 %v150, %v150
    %v174 = vmul.f32 %v152, %v152
    %v175 = vmul.f32 %v154, %v154
    %v176 = vmul.f32 %v156, %v156
    %vm177 = vcmask 130048
    %v178 = vsel %vm177, %v169, 0.0
    %179 = vadd.xlane.f32.xlu0 %v178
    %v180 = vpop.xlane.xlu0 %179
    %v181 = vsel %vm177, %v170, 0.0
    %182 = vadd.xlane.f32.xlu0 %v181
    %v183 = vpop.xlane.xlu0 %182
    %v184 = vsel %vm177, %v171, 0.0
    %185 = vadd.xlane.f32.xlu0 %v184
    %v186 = vpop.xlane.xlu0 %185
    %v187 = vsel %vm177, %v172, 0.0
    %188 = vadd.xlane.f32.xlu0 %v187
    %v189 = vpop.xlane.xlu0 %188
    %v190 = vsel %vm177, %v173, 0.0
    %191 = vadd.xlane.f32.xlu0 %v190
    %v192 = vpop.xlane.xlu0 %191
    %v193 = vsel %vm177, %v174, 0.0
    %194 = vadd.xlane.f32.xlu0 %v193
    %v195 = vpop.xlane.xlu0 %194
    %v196 = vsel %vm177, %v175, 0.0
    %197 = vadd.xlane.f32.xlu0 %v196
    %v198 = vpop.xlane.xlu0 %197
    %v199 = vsel %vm177, %v176, 0.0
    %200 = vadd.xlane.f32.xlu0 %v199
    %v201 = vpop.xlane.xlu0 %200
    %v202 = vmax.f32 %v180, 1e-24
    %v203 = vmax.f32 %v183, 1e-24
    %v204 = vmax.f32 %v186, 1e-24
    %v205 = vmax.f32 %v189, 1e-24
    %v206 = vmax.f32 %v192, 1e-24
    %v207 = vmax.f32 %v195, 1e-24
    %v208 = vmax.f32 %v198, 1e-24
    %v209 = vmax.f32 %v201, 1e-24
    %v210 = vrsqrt.pop %v202
    %v211 = vmul.f32 %v210, %v202
    %v212 = vmul.f32 %v211, %v210
    %v213 = vmul.f32 0.5, %v212
    %v214 = vsub.f32 1.5, %v213
    %v215 = vmul.f32 %v210, %v214
    %vm216 = vweird.f32 %v202
    %vm217 = vweird.f32 %v210
    %vm218 = vmor %vm216, %vm217
    %v219 = vsel %vm218, %v210, %v215
    %v220 = vrsqrt.pop %v203
    %v221 = vmul.f32 %v220, %v203
    %v222 = vmul.f32 %v221, %v220
    %v223 = vmul.f32 0.5, %v222
    %v224 = vsub.f32 1.5, %v223
    %v225 = vmul.f32 %v220, %v224
    %vm226 = vweird.f32 %v203
    %vm227 = vweird.f32 %v220
    %vm228 = vmor %vm226, %vm227
    %v229 = vsel %vm228, %v220, %v225
    %v230 = vrsqrt.pop %v204
    %v231 = vmul.f32 %v230, %v204
    %v232 = vmul.f32 %v231, %v230
    %v233 = vmul.f32 0.5, %v232
    %v234 = vsub.f32 1.5, %v233
    %v235 = vmul.f32 %v230, %v234
    %vm236 = vweird.f32 %v204
    %vm237 = vweird.f32 %v230
    %vm238 = vmor %vm236, %vm237
    %v239 = vsel %vm238, %v230, %v235
    %v240 = vrsqrt.pop %v205
    %v241 = vmul.f32 %v240, %v205
    %v242 = vmul.f32 %v241, %v240
    %v243 = vmul.f32 0.5, %v242
    %v244 = vsub.f32 1.5, %v243
    %v245 = vmul.f32 %v240, %v244
    %vm246 = vweird.f32 %v205
    %vm247 = vweird.f32 %v240
    %vm248 = vmor %vm246, %vm247
    %v249 = vsel %vm248, %v240, %v245
    %v250 = vrsqrt.pop %v206
    %v251 = vmul.f32 %v250, %v206
    %v252 = vmul.f32 %v251, %v250
    %v253 = vmul.f32 0.5, %v252
    %v254 = vsub.f32 1.5, %v253
    %v255 = vmul.f32 %v250, %v254
    %vm256 = vweird.f32 %v206
    %vm257 = vweird.f32 %v250
    %vm258 = vmor %vm256, %vm257
    %v259 = vsel %vm258, %v250, %v255
    %v260 = vrsqrt.pop %v207
    %v261 = vmul.f32 %v260, %v207
    %v262 = vmul.f32 %v261, %v260
    %v263 = vmul.f32 0.5, %v262
    %v264 = vsub.f32 1.5, %v263
    %v265 = vmul.f32 %v260, %v264
    %vm266 = vweird.f32 %v207
    %vm267 = vweird.f32 %v260
    %vm268 = vmor %vm266, %vm267
    %v269 = vsel %vm268, %v260, %v265
    %v270 = vrsqrt.pop %v208
    %v271 = vmul.f32 %v270, %v208
    %v272 = vmul.f32 %v271, %v270
    %v273 = vmul.f32 0.5, %v272
    %v274 = vsub.f32 1.5, %v273
    %v275 = vmul.f32 %v270, %v274
    %vm276 = vweird.f32 %v208
    %vm277 = vweird.f32 %v270
    %vm278 = vmor %vm276, %vm277
    %v279 = vsel %vm278, %v270, %v275
    %v280 = vrsqrt.pop %v209
    %v281 = vmul.f32 %v280, %v209
    %v282 = vmul.f32 %v281, %v280
    %v283 = vmul.f32 0.5, %v282
    %v284 = vsub.f32 1.5, %v283
    %v285 = vmul.f32 %v280, %v284
    %vm286 = vweird.f32 %v209
    %vm287 = vweird.f32 %v280
    %vm288 = vmor %vm286, %vm287
    %v289 = vsel %vm288, %v280, %v285
    %v290 = vmul.f32 %v134, %v219
    %v291 = vmul.f32 %v137, %v229
    %v292 = vmul.f32 %v140, %v239
    %v293 = vmul.f32 %v143, %v249
    %v294 = vmul.f32 %v150, %v259
    %v295 = vmul.f32 %v152, %v269
    %v296 = vmul.f32 %v154, %v279
    %v297 = vmul.f32 %v156, %v289
    %v298 = vsel %vm177, %v134, 0
    %v300 = vsel %vm177, %v137, 0
    %v302 = vsel %vm177, %v140, 0
    %v304 = vsel %vm177, %v143, 0
    %v306 = vsel %vm177, %v150, 0
    %v308 = vsel %vm177, %v152, 0
    %v310 = vsel %vm177, %v154, 0
    %v312 = vsel %vm177, %v156, 0
    %v315 = vsel %vm177, %v290, 0
    %v318 = vsel %vm177, %v291, 0
    %v321 = vsel %vm177, %v292, 0
    %v324 = vsel %vm177, %v293, 0
    %v327 = vsel %vm177, %v294, 0
    %v330 = vsel %vm177, %v295, 0
    %v333 = vsel %vm177, %v296, 0
    %v336 = vsel %vm177, %v297, 0
    %338 = vmatpush.xpose.msra.mxu0 0.0
    %339 = vmatpush.xpose.msra.mxu0 0.0
    %340 = vmatpush.xpose.msra.mxu0 0.0
    %341 = vmatpush.xpose.msra.mxu0 0.0
    %342 = vmatpush.xpose.msra.mxu0 0.0
    %343 = vmatpush.xpose.msra.mxu0 0.0
    %344 = vmatpush.xpose.msra.mxu0 0.0
    %345 = vmatpush.xpose.msra.mxu0 0.0
    %346 = vmatpush.xpose.msra.mxu0 %v336
    %347 = vmatpush.xpose.msra.mxu0 %v333
    %348 = vmatpush.xpose.msra.mxu0 %v330
    %349 = vmatpush.xpose.msra.mxu0 %v327
    %350 = vmatpush.xpose.msra.mxu0 %v324
    %351 = vmatpush.xpose.msra.mxu0 %v321
    %352 = vmatpush.xpose.msra.mxu0 %v318
    %353 = vmatpush.xpose.msra.mxu0 %v315
    %354 = vmatmul.f32.gmra.mxu0 %v298
    %v355 = vpop.f32.mrf.mxu0
    %v356 = vadd.f32 %v43, %v355
    %357 = vmatmul.f32.gmra.mxu0 %v300
    %v358 = vpop.f32.mrf.mxu0
    %v359 = vadd.f32 %v44, %v358
    %360 = vmatmul.f32.gmra.mxu0 %v302
    %v361 = vpop.f32.mrf.mxu0
    %v362 = vadd.f32 %v45, %v361
    %363 = vmatmul.f32.gmra.mxu0 %v304
    %v364 = vpop.f32.mrf.mxu0
    %v365 = vadd.f32 %v46, %v364
    %366 = vmatmul.f32.gmra.mxu0 %v306
    %v367 = vpop.f32.mrf.mxu0
    %v368 = vadd.f32 %v47, %v367
    %369 = vmatmul.f32.gmra.mxu0 %v308
    %v370 = vpop.f32.mrf.mxu0
    %v371 = vadd.f32 %v48, %v370
    %372 = vmatmul.f32.gmra.mxu0 %v310
    %v373 = vpop.f32.mrf.mxu0
    %v374 = vadd.f32 %v49, %v373
    %375 = vmatmul.f32.gmra.mxu0 %v312
    %v376 = vpop.f32.mrf.mxu0
    %v377 = vadd.f32 %v50, %v376
    %378 = vdwg.mxu0
    %vm379 = vcmask 523264
    %v380 = vsel %vm379, %v356, -inf
    %381 = vmax.xlane.f32.xlu0 %v380
    %v382 = vpop.xlane.xlu0 %381
    %v383 = vsel %vm379, %v359, -inf
    %384 = vmax.xlane.f32.xlu0 %v383
    %v385 = vpop.xlane.xlu0 %384
    %v386 = vsel %vm379, %v362, -inf
    %387 = vmax.xlane.f32.xlu0 %v386
    %v388 = vpop.xlane.xlu0 %387
    %v389 = vsel %vm379, %v365, -inf
    %390 = vmax.xlane.f32.xlu0 %v389
    %v391 = vpop.xlane.xlu0 %390
    %v392 = vsel %vm379, %v368, -inf
    %393 = vmax.xlane.f32.xlu0 %v392
    %v394 = vpop.xlane.xlu0 %393
    %v395 = vsel %vm379, %v371, -inf
    %396 = vmax.xlane.f32.xlu0 %v395
    %v397 = vpop.xlane.xlu0 %396
    %v398 = vsel %vm379, %v374, -inf
    %399 = vmax.xlane.f32.xlu0 %v398
    %v400 = vpop.xlane.xlu0 %399
    %v401 = vsel %vm379, %v377, -inf
    %402 = vmax.xlane.f32.xlu0 %v401
    %v403 = vpop.xlane.xlu0 %402
    %v404 = vsub.f32 %v356, %v382
    %v405 = vsub.f32 %v359, %v385
    %v406 = vsub.f32 %v362, %v388
    %v407 = vsub.f32 %v365, %v391
    %v408 = vsub.f32 %v368, %v394
    %v409 = vsub.f32 %v371, %v397
    %v410 = vsub.f32 %v374, %v400
    %v411 = vsub.f32 %v377, %v403
    %v412 = vmul.f32 %v404, 1.442695
    %v413 = vpow.pop %v412
    %v414 = vmul.f32 %v405, 1.442695
    %v415 = vpow.pop %v414
    %v416 = vmul.f32 %v406, 1.442695
    %v417 = vpow.pop %v416
    %v418 = vmul.f32 %v407, 1.442695
    %v419 = vpow.pop %v418
    %v420 = vmul.f32 %v408, 1.442695
    %v421 = vpow.pop %v420
    %v422 = vmul.f32 %v409, 1.442695
    %v423 = vpow.pop %v422
    %v424 = vmul.f32 %v410, 1.442695
    %v425 = vpow.pop %v424
    %v426 = vmul.f32 %v411, 1.442695
    %v427 = vpow.pop %v426
    %v428 = vsel %vm379, %v413, 0.0
    %429 = vadd.xlane.f32.xlu0 %v428
    %v430 = vpop.xlane.xlu0 %429
    %v431 = vsel %vm379, %v415, 0.0
    %432 = vadd.xlane.f32.xlu0 %v431
    %v433 = vpop.xlane.xlu0 %432
    %v434 = vsel %vm379, %v417, 0.0
    %435 = vadd.xlane.f32.xlu0 %v434
    %v436 = vpop.xlane.xlu0 %435
    %v437 = vsel %vm379, %v419, 0.0
    %438 = vadd.xlane.f32.xlu0 %v437
    %v439 = vpop.xlane.xlu0 %438
    %v440 = vsel %vm379, %v421, 0.0
    %441 = vadd.xlane.f32.xlu0 %v440
    %v442 = vpop.xlane.xlu0 %441
    %v443 = vsel %vm379, %v423, 0.0
    %444 = vadd.xlane.f32.xlu0 %v443
    %v445 = vpop.xlane.xlu0 %444
    %v446 = vsel %vm379, %v425, 0.0
    %447 = vadd.xlane.f32.xlu0 %v446
    %v448 = vpop.xlane.xlu0 %447
    %v449 = vsel %vm379, %v427, 0.0
    %450 = vadd.xlane.f32.xlu0 %v449
    %v451 = vpop.xlane.xlu0 %450
    %v452 = vrcp.pop %v430
    %v453 = vrcp.pop %v433
    %v454 = vrcp.pop %v436
    %v455 = vrcp.pop %v439
    %v456 = vrcp.pop %v442
    %v457 = vrcp.pop %v445
    %v458 = vrcp.pop %v448
    %v459 = vrcp.pop %v451
    %v460 = vmul.f32 %v413, %v452
    %v461 = vmul.f32 %v415, %v453
    %v462 = vmul.f32 %v417, %v454
    %v463 = vmul.f32 %v419, %v455
    %v464 = vmul.f32 %v421, %v456
    %v465 = vmul.f32 %v423, %v457
    %v466 = vmul.f32 %v425, %v458
    %v467 = vmul.f32 %v427, %v459
    %468 = vrot.lane.b32.xlu0 %v162, 96
    %v469 = vpop.permute.xlu0 %468
    %470 = vrot.lane.b32.xlu0 %v164, 96
    %v471 = vpop.permute.xlu0 %470
    %472 = vrot.lane.b32.xlu0 %v166, 96
    %v473 = vpop.permute.xlu0 %472
    %474 = vrot.lane.b32.xlu0 %v168, 96
    %v475 = vpop.permute.xlu0 %474
    %v485 = vsel %vm379, %v460, 0
    %v488 = vsel %vm379, %v461, 0
    %v491 = vsel %vm379, %v462, 0
    %v494 = vsel %vm379, %v463, 0
    %v497 = vsel %vm379, %v464, 0
    %v500 = vsel %vm379, %v465, 0
    %v503 = vsel %vm379, %v466, 0
    %v506 = vsel %vm379, %v467, 0
    %508 = vmatpush.msra.mxu0 0.0
    %509 = vmatpush.msra.mxu0 0.0
    %510 = vmatpush.msra.mxu0 0.0
    %511 = vmatpush.msra.mxu0 0.0
    %512 = vmatpush.msra.mxu0 0.0
    %513 = vmatpush.msra.mxu0 0.0
    %514 = vmatpush.msra.mxu0 0.0
    %515 = vmatpush.msra.mxu0 0.0
    %516 = vmatpush.msra.mxu0 %v475
    %517 = vmatpush.msra.mxu0 %v473
    %518 = vmatpush.msra.mxu0 %v471
    %519 = vmatpush.msra.mxu0 %v469
    %520 = vmatpush.msra.mxu0 %v168
    %521 = vmatpush.msra.mxu0 %v166
    %522 = vmatpush.msra.mxu0 %v164
    %523 = vmatpush.msra.mxu0 %v162
    %524 = vmatmul.f32.gmra.mxu0 %v485
    %v525 = vpop.f32.mrf.mxu0
    %v526 = vadd.f32 0.0, %v525
    %527 = vmatmul.f32.gmra.mxu0 %v488
    %v528 = vpop.f32.mrf.mxu0
    %v529 = vadd.f32 0.0, %v528
    %530 = vmatmul.f32.gmra.mxu0 %v491
    %v531 = vpop.f32.mrf.mxu0
    %v532 = vadd.f32 0.0, %v531
    %533 = vmatmul.f32.gmra.mxu0 %v494
    %v534 = vpop.f32.mrf.mxu0
    %v535 = vadd.f32 0.0, %v534
    %536 = vmatmul.f32.gmra.mxu0 %v497
    %v537 = vpop.f32.mrf.mxu0
    %v538 = vadd.f32 0.0, %v537
    %539 = vmatmul.f32.gmra.mxu0 %v500
    %v540 = vpop.f32.mrf.mxu0
    %v541 = vadd.f32 0.0, %v540
    %542 = vmatmul.f32.gmra.mxu0 %v503
    %v543 = vpop.f32.mrf.mxu0
    %v544 = vadd.f32 0.0, %v543
    %545 = vmatmul.f32.gmra.mxu0 %v506
    %v546 = vpop.f32.mrf.mxu0
    %v547 = vadd.f32 0.0, %v546
    %548 = vdwg.mxu0
    %v549 = vadd.f32 %v526, %v538
    %v550 = vadd.f32 %v529, %v541
    %v551 = vadd.f32 %v532, %v544
    %v552 = vadd.f32 %v535, %v547
    %v553 = vld [vmem:[#allocation2] sm:$0x1]
    %v554 = vperm.slane %v553, 0
    %v555 = vadd.f32 %v549, %v554
    %v556 = vadd.f32 %v550, %v554
    %v557 = vadd.f32 %v551, %v554
    %v558 = vadd.f32 %v552, %v554
    %v559 = vadd.f32 %v555, %v88
    %v560 = vadd.f32 %v556, %v91
    %v561 = vadd.f32 %v557, %v94
    %v562 = vadd.f32 %v558, %v97
    %v563 = vld [vmem:[#allocation2 + $0x1] sm:$0x1]
    %v564 = vld [vmem:[#allocation2 + $0x2] sm:$0x1]
    %v565 = vsel %vm103, %v559, 0.0
    %566 = vadd.xlane.f32.xlu0 %v565
    %v567 = vpop.xlane.xlu0 %566
    %v568 = vsel %vm103, %v560, 0.0
    %569 = vadd.xlane.f32.xlu0 %v568
    %v570 = vpop.xlane.xlu0 %569
    %v571 = vsel %vm103, %v561, 0.0
    %572 = vadd.xlane.f32.xlu0 %v571
    %v573 = vpop.xlane.xlu0 %572
    %v574 = vsel %vm103, %v562, 0.0
    %575 = vadd.xlane.f32.xlu0 %v574
    %v576 = vpop.xlane.xlu0 %575
    %v577 = vrcp.pop 32.0
    %v578 = vmul.f32 32.0, %v577
    %v579 = vsub.f32 1.0, %v578
    %v580 = vmul.f32 %v577, %v579
    %v581 = vadd.f32 %v577, %v580
    %vm582 = vweird.f32 %v577
    %v583 = vsel %vm582, %v577, %v581
    %v584 = vmul.f32 %v567, %v583
    %v585 = vmul.f32 %v570, %v583
    %v586 = vmul.f32 %v573, %v583
    %v587 = vmul.f32 %v576, %v583
    %v588 = vsub.f32 %v559, %v584
    %v589 = vsub.f32 %v560, %v585
    %v590 = vsub.f32 %v561, %v586
    %v591 = vsub.f32 %v562, %v587
    %v592 = vmul.f32 %v588, %v588
    %v593 = vmul.f32 %v589, %v589
    %v594 = vmul.f32 %v590, %v590
    %v595 = vmul.f32 %v591, %v591
    %v596 = vsel %vm103, %v592, 0.0
    %597 = vadd.xlane.f32.xlu0 %v596
    %v598 = vpop.xlane.xlu0 %597
    %v599 = vsel %vm103, %v593, 0.0
    %600 = vadd.xlane.f32.xlu0 %v599
    %v601 = vpop.xlane.xlu0 %600
    %v602 = vsel %vm103, %v594, 0.0
    %603 = vadd.xlane.f32.xlu0 %v602
    %v604 = vpop.xlane.xlu0 %603
    %v605 = vsel %vm103, %v595, 0.0
    %606 = vadd.xlane.f32.xlu0 %v605
    %v607 = vpop.xlane.xlu0 %606
    %v608 = vmul.f32 %v598, %v583
    %v609 = vmul.f32 %v601, %v583
    %v610 = vmul.f32 %v604, %v583
    %v611 = vmul.f32 %v607, %v583
    %v612 = vadd.f32 %v608, 1e-05
    %v613 = vadd.f32 %v609, 1e-05
    %v614 = vadd.f32 %v610, 1e-05
    %v615 = vadd.f32 %v611, 1e-05
    %v616 = vrsqrt.pop %v612
    %v617 = vmul.f32 %v616, %v612
    %v618 = vmul.f32 %v617, %v616
    %v619 = vmul.f32 0.5, %v618
    %v620 = vsub.f32 1.5, %v619
    %v621 = vmul.f32 %v616, %v620
    %vm622 = vweird.f32 %v612
    %vm623 = vweird.f32 %v616
    %vm624 = vmor %vm622, %vm623
    %v625 = vsel %vm624, %v616, %v621
    %v626 = vrsqrt.pop %v613
    %v627 = vmul.f32 %v626, %v613
    %v628 = vmul.f32 %v627, %v626
    %v629 = vmul.f32 0.5, %v628
    %v630 = vsub.f32 1.5, %v629
    %v631 = vmul.f32 %v626, %v630
    %vm632 = vweird.f32 %v613
    %vm633 = vweird.f32 %v626
    %vm634 = vmor %vm632, %vm633
    %v635 = vsel %vm634, %v626, %v631
    %v636 = vrsqrt.pop %v614
    %v637 = vmul.f32 %v636, %v614
    %v638 = vmul.f32 %v637, %v636
    %v639 = vmul.f32 0.5, %v638
    %v640 = vsub.f32 1.5, %v639
    %v641 = vmul.f32 %v636, %v640
    %vm642 = vweird.f32 %v614
    %vm643 = vweird.f32 %v636
    %vm644 = vmor %vm642, %vm643
    %v645 = vsel %vm644, %v636, %v641
    %v646 = vrsqrt.pop %v615
    %v647 = vmul.f32 %v646, %v615
    %v648 = vmul.f32 %v647, %v646
    %v649 = vmul.f32 0.5, %v648
    %v650 = vsub.f32 1.5, %v649
    %v651 = vmul.f32 %v646, %v650
    %vm652 = vweird.f32 %v615
    %vm653 = vweird.f32 %v646
    %vm654 = vmor %vm652, %vm653
    %v655 = vsel %vm654, %v646, %v651
    %v656 = vmul.f32 %v588, %v625
    %v657 = vmul.f32 %v589, %v635
    %v658 = vmul.f32 %v590, %v645
    %v659 = vmul.f32 %v591, %v655
    %v660 = vperm.slane %v563, 0
    %v661 = vmul.f32 %v656, %v660
    %v662 = vmul.f32 %v657, %v660
    %v663 = vmul.f32 %v658, %v660
    %v664 = vmul.f32 %v659, %v660
    %v665 = vperm.slane %v564, 0
    %v666 = vadd.f32 %v661, %v665
    %v667 = vadd.f32 %v662, %v665
    %v668 = vadd.f32 %v663, %v665
    %v669 = vadd.f32 %v664, %v665
    %v670 = vld [vmem:[#allocation2 + $0x5] sm:$0x1]
    %v671 = vld [vmem:[#allocation2 + $0x6] sm:$0x1]
    %v672 = vsel %vm103, %v666, 0.0
    %673 = vadd.xlane.f32.xlu0 %v672
    %v674 = vpop.xlane.xlu0 %673
    %v675 = vsel %vm103, %v667, 0.0
    %676 = vadd.xlane.f32.xlu0 %v675
    %v677 = vpop.xlane.xlu0 %676
    %v678 = vsel %vm103, %v668, 0.0
    %679 = vadd.xlane.f32.xlu0 %v678
    %v680 = vpop.xlane.xlu0 %679
    %v681 = vsel %vm103, %v669, 0.0
    %682 = vadd.xlane.f32.xlu0 %v681
    %v683 = vpop.xlane.xlu0 %682
    %v684 = vmul.f32 %v674, %v583
    %v685 = vmul.f32 %v677, %v583
    %v686 = vmul.f32 %v680, %v583
    %v687 = vmul.f32 %v683, %v583
    %v688 = vsub.f32 %v666, %v684
    %v689 = vsub.f32 %v667, %v685
    %v690 = vsub.f32 %v668, %v686
    %v691 = vsub.f32 %v669, %v687
    %v692 = vmul.f32 %v688, %v688
    %v693 = vmul.f32 %v689, %v689
    %v694 = vmul.f32 %v690, %v690
    %v695 = vmul.f32 %v691, %v691
    %v696 = vsel %vm103, %v692, 0.0
    %697 = vadd.xlane.f32.xlu0 %v696
    %v698 = vpop.xlane.xlu0 %697
    %v699 = vsel %vm103, %v693, 0.0
    %700 = vadd.xlane.f32.xlu0 %v699
    %v701 = vpop.xlane.xlu0 %700
    %v702 = vsel %vm103, %v694, 0.0
    %703 = vadd.xlane.f32.xlu0 %v702
    %v704 = vpop.xlane.xlu0 %703
    %v705 = vsel %vm103, %v695, 0.0
    %706 = vadd.xlane.f32.xlu0 %v705
    %v707 = vpop.xlane.xlu0 %706
    %v708 = vmul.f32 %v698, %v583
    %v709 = vmul.f32 %v701, %v583
    %v710 = vmul.f32 %v704, %v583
    %v711 = vmul.f32 %v707, %v583
    %v712 = vadd.f32 %v708, 1e-06
    %v713 = vadd.f32 %v709, 1e-06
    %v714 = vadd.f32 %v710, 1e-06
    %v715 = vadd.f32 %v711, 1e-06
    %v716 = vrsqrt.pop %v712
    %v717 = vmul.f32 %v716, %v712
    %v718 = vmul.f32 %v717, %v716
    %v719 = vmul.f32 0.5, %v718
    %v720 = vsub.f32 1.5, %v719
    %v721 = vmul.f32 %v716, %v720
    %vm722 = vweird.f32 %v712
    %vm723 = vweird.f32 %v716
    %vm724 = vmor %vm722, %vm723
    %v725 = vsel %vm724, %v716, %v721
    %v726 = vrsqrt.pop %v713
    %v727 = vmul.f32 %v726, %v713
    %v728 = vmul.f32 %v727, %v726
    %v729 = vmul.f32 0.5, %v728
    %v730 = vsub.f32 1.5, %v729
    %v731 = vmul.f32 %v726, %v730
    %vm732 = vweird.f32 %v713
    %vm733 = vweird.f32 %v726
    %vm734 = vmor %vm732, %vm733
    %v735 = vsel %vm734, %v726, %v731
    %v736 = vrsqrt.pop %v714
    %v737 = vmul.f32 %v736, %v714
    %v738 = vmul.f32 %v737, %v736
    %v739 = vmul.f32 0.5, %v738
    %v740 = vsub.f32 1.5, %v739
    %v741 = vmul.f32 %v736, %v740
    %vm742 = vweird.f32 %v714
    %vm743 = vweird.f32 %v736
    %vm744 = vmor %vm742, %vm743
    %v745 = vsel %vm744, %v736, %v741
    %v746 = vrsqrt.pop %v715
    %v747 = vmul.f32 %v746, %v715
    %v748 = vmul.f32 %v747, %v746
    %v749 = vmul.f32 0.5, %v748
    %v750 = vsub.f32 1.5, %v749
    %v751 = vmul.f32 %v746, %v750
    %vm752 = vweird.f32 %v715
    %vm753 = vweird.f32 %v746
    %vm754 = vmor %vm752, %vm753
    %v755 = vsel %vm754, %v746, %v751
    %v756 = vmul.f32 %v688, %v725
    %v757 = vmul.f32 %v689, %v735
    %v758 = vmul.f32 %v690, %v745
    %v759 = vmul.f32 %v691, %v755
    %v760 = vperm.slane %v670, 0
    %v761 = vmul.f32 %v756, %v760
    %v762 = vmul.f32 %v757, %v760
    %v763 = vmul.f32 %v758, %v760
    %v764 = vmul.f32 %v759, %v760
    %v765 = vperm.slane %v671, 0
    %v766 = vadd.f32 %v761, %v765
    %v767 = vadd.f32 %v762, %v765
    %v768 = vadd.f32 %v763, %v765
    %v769 = vadd.f32 %v764, %v765
    %v770 = vld [vmem:[%s3] sm:$0xff]
    %v771 = vld [vmem:[%s3 + $0x8] sm:$0xff]
    %v772 = vld [vmem:[%s3 + $0x10] sm:$0xff]
    %v773 = vld [vmem:[%s3 + $0x18] sm:$0xff]
    %v774 = vld [vmem:[#allocation2 + $0x3] sm:$0x1]
    %v775 = vperm.slane %v774, 0
    %v777 = vsel %vm103, %v766, 0
    %v780 = vsel %vm103, %v767, 0
    %v783 = vsel %vm103, %v768, 0
    %v786 = vsel %vm103, %v769, 0
    %788 = vmatpush.msra.mxu0 0.0
    %789 = vmatpush.msra.mxu0 0.0
    %790 = vmatpush.msra.mxu0 0.0
    %791 = vmatpush.msra.mxu0 0.0
    %792 = vmatpush.msra.mxu0 0.0
    %793 = vmatpush.msra.mxu0 0.0
    %794 = vmatpush.msra.mxu0 0.0
    %795 = vmatpush.msra.mxu0 0.0
    %796 = vmatpush.msra.mxu0 0.0
    %797 = vmatpush.msra.mxu0 0.0
    %798 = vmatpush.msra.mxu0 0.0
    %799 = vmatpush.msra.mxu0 0.0
    %800 = vmatpush.msra.mxu0 %v773
    %801 = vmatpush.msra.mxu0 %v772
    %802 = vmatpush.msra.mxu0 %v771
    %803 = vmatpush.msra.mxu0 %v770
    %804 = vmatmul.f32.gmra.mxu0 %v777
    %v805 = vpop.f32.mrf.mxu0
    %v806 = vadd.f32 %v775, %v805
    %807 = vmatmul.f32.gmra.mxu0 %v780
    %v808 = vpop.f32.mrf.mxu0
    %v809 = vadd.f32 %v775, %v808
    %810 = vmatmul.f32.gmra.mxu0 %v783
    %v811 = vpop.f32.mrf.mxu0
    %v812 = vadd.f32 %v775, %v811
    %813 = vmatmul.f32.gmra.mxu0 %v786
    %v814 = vpop.f32.mrf.mxu0
    %v815 = vadd.f32 %v775, %v814
    %816 = vdwg.mxu0
    %v817 = vmax.f32 %v806, 0.0
    %v818 = vmax.f32 %v809, 0.0
    %v819 = vmax.f32 %v812, 0.0
    %v820 = vmax.f32 %v815, 0.0
    %v821 = vld [vmem:[%s4] sm:$0xff]
    %v822 = vld [vmem:[%s4 + $0x8] sm:$0xff]
    %v823 = vld [vmem:[%s4 + $0x10] sm:$0xff]
    %v824 = vld [vmem:[%s4 + $0x18] sm:$0xff]
    %v825 = vld [vmem:[%s4 + $0x20] sm:$0xff]
    %v826 = vld [vmem:[%s4 + $0x28] sm:$0xff]
    %v827 = vld [vmem:[%s4 + $0x30] sm:$0xff]
    %v828 = vld [vmem:[%s4 + $0x38] sm:$0xff]
    %v829 = vld [vmem:[#allocation2 + $0x4] sm:$0x1]
    %v830 = vperm.slane %v829, 0
    %v832 = vsel %vm379, %v817, 0
    %v835 = vsel %vm379, %v818, 0
    %v838 = vsel %vm379, %v819, 0
    %v841 = vsel %vm379, %v820, 0
    %843 = vmatpush.msra.mxu0 0.0
    %844 = vmatpush.msra.mxu0 0.0
    %845 = vmatpush.msra.mxu0 0.0
    %846 = vmatpush.msra.mxu0 0.0
    %847 = vmatpush.msra.mxu0 0.0
    %848 = vmatpush.msra.mxu0 0.0
    %849 = vmatpush.msra.mxu0 0.0
    %850 = vmatpush.msra.mxu0 0.0
    %851 = vmatpush.msra.mxu0 %v828
    %852 = vmatpush.msra.mxu0 %v827
    %853 = vmatpush.msra.mxu0 %v826
    %854 = vmatpush.msra.mxu0 %v825
    %855 = vmatpush.msra.mxu0 %v824
    %856 = vmatpush.msra.mxu0 %v823
    %857 = vmatpush.msra.mxu0 %v822
    %858 = vmatpush.msra.mxu0 %v821
    %859 = vmatmul.f32.gmra.mxu0 %v832
    %v860 = vpop.f32.mrf.mxu0
    %v861 = vadd.f32 %v830, %v860
    %862 = vmatmul.f32.gmra.mxu0 %v835
    %v863 = vpop.f32.mrf.mxu0
    %v864 = vadd.f32 %v830, %v863
    %865 = vmatmul.f32.gmra.mxu0 %v838
    %v866 = vpop.f32.mrf.mxu0
    %v867 = vadd.f32 %v830, %v866
    %868 = vmatmul.f32.gmra.mxu0 %v841
    %v869 = vpop.f32.mrf.mxu0
    %v870 = vadd.f32 %v830, %v869
    %871 = vdwg.mxu0
    %v872 = vadd.f32 %v861, %v666
    %v873 = vadd.f32 %v864, %v667
    %v874 = vadd.f32 %v867, %v668
    %v875 = vadd.f32 %v870, %v669
    %s876 = scalar_lea.vmem %s2, 32
    %v877 = vld [vmem:[%s876] sm:$0xff]
    %v878 = vld [vmem:[%s876 + $0x8] sm:$0xff]
    %v879 = vld [vmem:[%s876 + $0x10] sm:$0xff]
    %v880 = vld [vmem:[%s876 + $0x18] sm:$0xff]
    %v882 = vsel %vm103, %v872, 0
    %v885 = vsel %vm103, %v873, 0
    %v888 = vsel %vm103, %v874, 0
    %v891 = vsel %vm103, %v875, 0
    %893 = vmatpush.msra.mxu0 0.0
    %894 = vmatpush.msra.mxu0 0.0
    %895 = vmatpush.msra.mxu0 0.0
    %896 = vmatpush.msra.mxu0 0.0
    %897 = vmatpush.msra.mxu0 0.0
    %898 = vmatpush.msra.mxu0 0.0
    %899 = vmatpush.msra.mxu0 0.0
    %900 = vmatpush.msra.mxu0 0.0
    %901 = vmatpush.msra.mxu0 0.0
    %902 = vmatpush.msra.mxu0 0.0
    %903 = vmatpush.msra.mxu0 0.0
    %904 = vmatpush.msra.mxu0 0.0
    %905 = vmatpush.msra.mxu0 %v880
    %906 = vmatpush.msra.mxu0 %v879
    %907 = vmatpush.msra.mxu0 %v878
    %908 = vmatpush.msra.mxu0 %v877
    %909 = vmatmul.f32.gmra.mxu0 %v882
    %v910 = vpop.f32.mrf.mxu0
    %v911 = vadd.f32 0.0, %v910
    %912 = vmatmul.f32.gmra.mxu0 %v885
    %v913 = vpop.f32.mrf.mxu0
    %v914 = vadd.f32 0.0, %v913
    %915 = vmatmul.f32.gmra.mxu0 %v888
    %v916 = vpop.f32.mrf.mxu0
    %v917 = vadd.f32 0.0, %v916
    %918 = vmatmul.f32.gmra.mxu0 %v891
    %v919 = vpop.f32.mrf.mxu0
    %v920 = vadd.f32 0.0, %v919
    %921 = vdwg.mxu0
    %926 = vrot.lane.b32.xlu0 %v911, 112
    %v927 = vpop.permute.xlu0 %926
    %928 = vrot.lane.b32.xlu0 %v914, 112
    %v929 = vpop.permute.xlu0 %928
    %930 = vrot.lane.b32.xlu0 %v917, 112
    %v931 = vpop.permute.xlu0 %930
    %932 = vrot.lane.b32.xlu0 %v920, 112
    %v933 = vpop.permute.xlu0 %932
    %938 = vrot.lane.b32.xlu0 %v911, 96
    %v939 = vpop.permute.xlu0 %938
    %940 = vrot.lane.b32.xlu0 %v914, 96
    %v941 = vpop.permute.xlu0 %940
    %942 = vrot.lane.b32.xlu0 %v917, 96
    %v943 = vpop.permute.xlu0 %942
    %944 = vrot.lane.b32.xlu0 %v920, 96
    %v945 = vpop.permute.xlu0 %944
    %v946 = vmul.f32 %v911, %v911
    %v947 = vmul.f32 %v914, %v914
    %v948 = vmul.f32 %v917, %v917
    %v949 = vmul.f32 %v920, %v920
    %v950 = vmul.f32 %v927, %v927
    %v951 = vmul.f32 %v929, %v929
    %v952 = vmul.f32 %v931, %v931
    %v953 = vmul.f32 %v933, %v933
    %v954 = vsel %vm177, %v946, 0.0
    %955 = vadd.xlane.f32.xlu0 %v954
    %v956 = vpop.xlane.xlu0 %955
    %v957 = vsel %vm177, %v947, 0.0
    %958 = vadd.xlane.f32.xlu0 %v957
    %v959 = vpop.xlane.xlu0 %958
    %v960 = vsel %vm177, %v948, 0.0
    %961 = vadd.xlane.f32.xlu0 %v960
    %v962 = vpop.xlane.xlu0 %961
    %v963 = vsel %vm177, %v949, 0.0
    %964 = vadd.xlane.f32.xlu0 %v963
    %v965 = vpop.xlane.xlu0 %964
    %v966 = vsel %vm177, %v950, 0.0
    %967 = vadd.xlane.f32.xlu0 %v966
    %v968 = vpop.xlane.xlu0 %967
    %v969 = vsel %vm177, %v951, 0.0
    %970 = vadd.xlane.f32.xlu0 %v969
    %v971 = vpop.xlane.xlu0 %970
    %v972 = vsel %vm177, %v952, 0.0
    %973 = vadd.xlane.f32.xlu0 %v972
    %v974 = vpop.xlane.xlu0 %973
    %v975 = vsel %vm177, %v953, 0.0
    %976 = vadd.xlane.f32.xlu0 %v975
    %v977 = vpop.xlane.xlu0 %976
    %v978 = vmax.f32 %v956, 1e-24
    %v979 = vmax.f32 %v959, 1e-24
    %v980 = vmax.f32 %v962, 1e-24
    %v981 = vmax.f32 %v965, 1e-24
    %v982 = vmax.f32 %v968, 1e-24
    %v983 = vmax.f32 %v971, 1e-24
    %v984 = vmax.f32 %v974, 1e-24
    %v985 = vmax.f32 %v977, 1e-24
    %v986 = vrsqrt.pop %v978
    %v987 = vmul.f32 %v986, %v978
    %v988 = vmul.f32 %v987, %v986
    %v989 = vmul.f32 0.5, %v988
    %v990 = vsub.f32 1.5, %v989
    %v991 = vmul.f32 %v986, %v990
    %vm992 = vweird.f32 %v978
    %vm993 = vweird.f32 %v986
    %vm994 = vmor %vm992, %vm993
    %v995 = vsel %vm994, %v986, %v991
    %v996 = vrsqrt.pop %v979
    %v997 = vmul.f32 %v996, %v979
    %v998 = vmul.f32 %v997, %v996
    %v999 = vmul.f32 0.5, %v998
    %v1000 = vsub.f32 1.5, %v999
    %v1001 = vmul.f32 %v996, %v1000
    %vm1002 = vweird.f32 %v979
    %vm1003 = vweird.f32 %v996
    %vm1004 = vmor %vm1002, %vm1003
    %v1005 = vsel %vm1004, %v996, %v1001
    %v1006 = vrsqrt.pop %v980
    %v1007 = vmul.f32 %v1006, %v980
    %v1008 = vmul.f32 %v1007, %v1006
    %v1009 = vmul.f32 0.5, %v1008
    %v1010 = vsub.f32 1.5, %v1009
    %v1011 = vmul.f32 %v1006, %v1010
    %vm1012 = vweird.f32 %v980
    %vm1013 = vweird.f32 %v1006
    %vm1014 = vmor %vm1012, %vm1013
    %v1015 = vsel %vm1014, %v1006, %v1011
    %v1016 = vrsqrt.pop %v981
    %v1017 = vmul.f32 %v1016, %v981
    %v1018 = vmul.f32 %v1017, %v1016
    %v1019 = vmul.f32 0.5, %v1018
    %v1020 = vsub.f32 1.5, %v1019
    %v1021 = vmul.f32 %v1016, %v1020
    %vm1022 = vweird.f32 %v981
    %vm1023 = vweird.f32 %v1016
    %vm1024 = vmor %vm1022, %vm1023
    %v1025 = vsel %vm1024, %v1016, %v1021
    %v1026 = vrsqrt.pop %v982
    %v1027 = vmul.f32 %v1026, %v982
    %v1028 = vmul.f32 %v1027, %v1026
    %v1029 = vmul.f32 0.5, %v1028
    %v1030 = vsub.f32 1.5, %v1029
    %v1031 = vmul.f32 %v1026, %v1030
    %vm1032 = vweird.f32 %v982
    %vm1033 = vweird.f32 %v1026
    %vm1034 = vmor %vm1032, %vm1033
    %v1035 = vsel %vm1034, %v1026, %v1031
    %v1036 = vrsqrt.pop %v983
    %v1037 = vmul.f32 %v1036, %v983
    %v1038 = vmul.f32 %v1037, %v1036
    %v1039 = vmul.f32 0.5, %v1038
    %v1040 = vsub.f32 1.5, %v1039
    %v1041 = vmul.f32 %v1036, %v1040
    %vm1042 = vweird.f32 %v983
    %vm1043 = vweird.f32 %v1036
    %vm1044 = vmor %vm1042, %vm1043
    %v1045 = vsel %vm1044, %v1036, %v1041
    %v1046 = vrsqrt.pop %v984
    %v1047 = vmul.f32 %v1046, %v984
    %v1048 = vmul.f32 %v1047, %v1046
    %v1049 = vmul.f32 0.5, %v1048
    %v1050 = vsub.f32 1.5, %v1049
    %v1051 = vmul.f32 %v1046, %v1050
    %vm1052 = vweird.f32 %v984
    %vm1053 = vweird.f32 %v1046
    %vm1054 = vmor %vm1052, %vm1053
    %v1055 = vsel %vm1054, %v1046, %v1051
    %v1056 = vrsqrt.pop %v985
    %v1057 = vmul.f32 %v1056, %v985
    %v1058 = vmul.f32 %v1057, %v1056
    %v1059 = vmul.f32 0.5, %v1058
    %v1060 = vsub.f32 1.5, %v1059
    %v1061 = vmul.f32 %v1056, %v1060
    %vm1062 = vweird.f32 %v985
    %vm1063 = vweird.f32 %v1056
    %vm1064 = vmor %vm1062, %vm1063
    %v1065 = vsel %vm1064, %v1056, %v1061
    %v1066 = vmul.f32 %v911, %v995
    %v1067 = vmul.f32 %v914, %v1005
    %v1068 = vmul.f32 %v917, %v1015
    %v1069 = vmul.f32 %v920, %v1025
    %v1070 = vmul.f32 %v927, %v1035
    %v1071 = vmul.f32 %v929, %v1045
    %v1072 = vmul.f32 %v931, %v1055
    %v1073 = vmul.f32 %v933, %v1065
    %v1074 = vsel %vm177, %v911, 0
    %v1076 = vsel %vm177, %v914, 0
    %v1078 = vsel %vm177, %v917, 0
    %v1080 = vsel %vm177, %v920, 0
    %v1082 = vsel %vm177, %v927, 0
    %v1084 = vsel %vm177, %v929, 0
    %v1086 = vsel %vm177, %v931, 0
    %v1088 = vsel %vm177, %v933, 0
    %v1091 = vsel %vm177, %v1066, 0
    %v1094 = vsel %vm177, %v1067, 0
    %v1097 = vsel %vm177, %v1068, 0
    %v1100 = vsel %vm177, %v1069, 0
    %v1103 = vsel %vm177, %v1070, 0
    %v1106 = vsel %vm177, %v1071, 0
    %v1109 = vsel %vm177, %v1072, 0
    %v1112 = vsel %vm177, %v1073, 0
    %1114 = vmatpush.xpose.msra.mxu0 0.0
    %1115 = vmatpush.xpose.msra.mxu0 0.0
    %1116 = vmatpush.xpose.msra.mxu0 0.0
    %1117 = vmatpush.xpose.msra.mxu0 0.0
    %1118 = vmatpush.xpose.msra.mxu0 0.0
    %1119 = vmatpush.xpose.msra.mxu0 0.0
    %1120 = vmatpush.xpose.msra.mxu0 0.0
    %1121 = vmatpush.xpose.msra.mxu0 0.0
    %1122 = vmatpush.xpose.msra.mxu0 %v1112
    %1123 = vmatpush.xpose.msra.mxu0 %v1109
    %1124 = vmatpush.xpose.msra.mxu0 %v1106
    %1125 = vmatpush.xpose.msra.mxu0 %v1103
    %1126 = vmatpush.xpose.msra.mxu0 %v1100
    %1127 = vmatpush.xpose.msra.mxu0 %v1097
    %1128 = vmatpush.xpose.msra.mxu0 %v1094
    %1129 = vmatpush.xpose.msra.mxu0 %v1091
    %1130 = vmatmul.f32.gmra.mxu0 %v1074
    %v1131 = vpop.f32.mrf.mxu0
    %v1132 = vadd.f32 %v43, %v1131
    %1133 = vmatmul.f32.gmra.mxu0 %v1076
    %v1134 = vpop.f32.mrf.mxu0
    %v1135 = vadd.f32 %v44, %v1134
    %1136 = vmatmul.f32.gmra.mxu0 %v1078
    %v1137 = vpop.f32.mrf.mxu0
    %v1138 = vadd.f32 %v45, %v1137
    %1139 = vmatmul.f32.gmra.mxu0 %v1080
    %v1140 = vpop.f32.mrf.mxu0
    %v1141 = vadd.f32 %v46, %v1140
    %1142 = vmatmul.f32.gmra.mxu0 %v1082
    %v1143 = vpop.f32.mrf.mxu0
    %v1144 = vadd.f32 %v47, %v1143
    %1145 = vmatmul.f32.gmra.mxu0 %v1084
    %v1146 = vpop.f32.mrf.mxu0
    %v1147 = vadd.f32 %v48, %v1146
    %1148 = vmatmul.f32.gmra.mxu0 %v1086
    %v1149 = vpop.f32.mrf.mxu0
    %v1150 = vadd.f32 %v49, %v1149
    %1151 = vmatmul.f32.gmra.mxu0 %v1088
    %v1152 = vpop.f32.mrf.mxu0
    %v1153 = vadd.f32 %v50, %v1152
    %1154 = vdwg.mxu0
    %v1155 = vsel %vm379, %v1132, -inf
    %1156 = vmax.xlane.f32.xlu0 %v1155
    %v1157 = vpop.xlane.xlu0 %1156
    %v1158 = vsel %vm379, %v1135, -inf
    %1159 = vmax.xlane.f32.xlu0 %v1158
    %v1160 = vpop.xlane.xlu0 %1159
    %v1161 = vsel %vm379, %v1138, -inf
    %1162 = vmax.xlane.f32.xlu0 %v1161
    %v1163 = vpop.xlane.xlu0 %1162
    %v1164 = vsel %vm379, %v1141, -inf
    %1165 = vmax.xlane.f32.xlu0 %v1164
    %v1166 = vpop.xlane.xlu0 %1165
    %v1167 = vsel %vm379, %v1144, -inf
    %1168 = vmax.xlane.f32.xlu0 %v1167
    %v1169 = vpop.xlane.xlu0 %1168
    %v1170 = vsel %vm379, %v1147, -inf
    %1171 = vmax.xlane.f32.xlu0 %v1170
    %v1172 = vpop.xlane.xlu0 %1171
    %v1173 = vsel %vm379, %v1150, -inf
    %1174 = vmax.xlane.f32.xlu0 %v1173
    %v1175 = vpop.xlane.xlu0 %1174
    %v1176 = vsel %vm379, %v1153, -inf
    %1177 = vmax.xlane.f32.xlu0 %v1176
    %v1178 = vpop.xlane.xlu0 %1177
    %v1179 = vsub.f32 %v1132, %v1157
    %v1180 = vsub.f32 %v1135, %v1160
    %v1181 = vsub.f32 %v1138, %v1163
    %v1182 = vsub.f32 %v1141, %v1166
    %v1183 = vsub.f32 %v1144, %v1169
    %v1184 = vsub.f32 %v1147, %v1172
    %v1185 = vsub.f32 %v1150, %v1175
    %v1186 = vsub.f32 %v1153, %v1178
    %v1187 = vmul.f32 %v1179, 1.442695
    %v1188 = vpow.pop %v1187
    %v1189 = vmul.f32 %v1180, 1.442695
    %v1190 = vpow.pop %v1189
    %v1191 = vmul.f32 %v1181, 1.442695
    %v1192 = vpow.pop %v1191
    %v1193 = vmul.f32 %v1182, 1.442695
    %v1194 = vpow.pop %v1193
    %v1195 = vmul.f32 %v1183, 1.442695
    %v1196 = vpow.pop %v1195
    %v1197 = vmul.f32 %v1184, 1.442695
    %v1198 = vpow.pop %v1197
    %v1199 = vmul.f32 %v1185, 1.442695
    %v1200 = vpow.pop %v1199
    %v1201 = vmul.f32 %v1186, 1.442695
    %v1202 = vpow.pop %v1201
    %v1203 = vsel %vm379, %v1188, 0.0
    %1204 = vadd.xlane.f32.xlu0 %v1203
    %v1205 = vpop.xlane.xlu0 %1204
    %v1206 = vsel %vm379, %v1190, 0.0
    %1207 = vadd.xlane.f32.xlu0 %v1206
    %v1208 = vpop.xlane.xlu0 %1207
    %v1209 = vsel %vm379, %v1192, 0.0
    %1210 = vadd.xlane.f32.xlu0 %v1209
    %v1211 = vpop.xlane.xlu0 %1210
    %v1212 = vsel %vm379, %v1194, 0.0
    %1213 = vadd.xlane.f32.xlu0 %v1212
    %v1214 = vpop.xlane.xlu0 %1213
    %v1215 = vsel %vm379, %v1196, 0.0
    %1216 = vadd.xlane.f32.xlu0 %v1215
    %v1217 = vpop.xlane.xlu0 %1216
    %v1218 = vsel %vm379, %v1198, 0.0
    %1219 = vadd.xlane.f32.xlu0 %v1218
    %v1220 = vpop.xlane.xlu0 %1219
    %v1221 = vsel %vm379, %v1200, 0.0
    %1222 = vadd.xlane.f32.xlu0 %v1221
    %v1223 = vpop.xlane.xlu0 %1222
    %v1224 = vsel %vm379, %v1202, 0.0
    %1225 = vadd.xlane.f32.xlu0 %v1224
    %v1226 = vpop.xlane.xlu0 %1225
    %v1227 = vrcp.pop %v1205
    %v1228 = vrcp.pop %v1208
    %v1229 = vrcp.pop %v1211
    %v1230 = vrcp.pop %v1214
    %v1231 = vrcp.pop %v1217
    %v1232 = vrcp.pop %v1220
    %v1233 = vrcp.pop %v1223
    %v1234 = vrcp.pop %v1226
    %v1235 = vmul.f32 %v1188, %v1227
    %v1236 = vmul.f32 %v1190, %v1228
    %v1237 = vmul.f32 %v1192, %v1229
    %v1238 = vmul.f32 %v1194, %v1230
    %v1239 = vmul.f32 %v1196, %v1231
    %v1240 = vmul.f32 %v1198, %v1232
    %v1241 = vmul.f32 %v1200, %v1233
    %v1242 = vmul.f32 %v1202, %v1234
    %1243 = vrot.lane.b32.xlu0 %v939, 96
    %v1244 = vpop.permute.xlu0 %1243
    %1245 = vrot.lane.b32.xlu0 %v941, 96
    %v1246 = vpop.permute.xlu0 %1245
    %1247 = vrot.lane.b32.xlu0 %v943, 96
    %v1248 = vpop.permute.xlu0 %1247
    %1249 = vrot.lane.b32.xlu0 %v945, 96
    %v1250 = vpop.permute.xlu0 %1249
    %v1260 = vsel %vm379, %v1235, 0
    %v1263 = vsel %vm379, %v1236, 0
    %v1266 = vsel %vm379, %v1237, 0
    %v1269 = vsel %vm379, %v1238, 0
    %v1272 = vsel %vm379, %v1239, 0
    %v1275 = vsel %vm379, %v1240, 0
    %v1278 = vsel %vm379, %v1241, 0
    %v1281 = vsel %vm379, %v1242, 0
    %1283 = vmatpush.msra.mxu0 0.0
    %1284 = vmatpush.msra.mxu0 0.0
    %1285 = vmatpush.msra.mxu0 0.0
    %1286 = vmatpush.msra.mxu0 0.0
    %1287 = vmatpush.msra.mxu0 0.0
    %1288 = vmatpush.msra.mxu0 0.0
    %1289 = vmatpush.msra.mxu0 0.0
    %1290 = vmatpush.msra.mxu0 0.0
    %1291 = vmatpush.msra.mxu0 %v1250
    %1292 = vmatpush.msra.mxu0 %v1248
    %1293 = vmatpush.msra.mxu0 %v1246
    %1294 = vmatpush.msra.mxu0 %v1244
    %1295 = vmatpush.msra.mxu0 %v945
    %1296 = vmatpush.msra.mxu0 %v943
    %1297 = vmatpush.msra.mxu0 %v941
    %1298 = vmatpush.msra.mxu0 %v939
    %1299 = vmatmul.f32.gmra.mxu0 %v1260
    %v1300 = vpop.f32.mrf.mxu0
    %v1301 = vadd.f32 0.0, %v1300
    %1302 = vmatmul.f32.gmra.mxu0 %v1263
    %v1303 = vpop.f32.mrf.mxu0
    %v1304 = vadd.f32 0.0, %v1303
    %1305 = vmatmul.f32.gmra.mxu0 %v1266
    %v1306 = vpop.f32.mrf.mxu0
    %v1307 = vadd.f32 0.0, %v1306
    %1308 = vmatmul.f32.gmra.mxu0 %v1269
    %v1309 = vpop.f32.mrf.mxu0
    %v1310 = vadd.f32 0.0, %v1309
    %1311 = vmatmul.f32.gmra.mxu0 %v1272
    %v1312 = vpop.f32.mrf.mxu0
    %v1313 = vadd.f32 0.0, %v1312
    %1314 = vmatmul.f32.gmra.mxu0 %v1275
    %v1315 = vpop.f32.mrf.mxu0
    %v1316 = vadd.f32 0.0, %v1315
    %1317 = vmatmul.f32.gmra.mxu0 %v1278
    %v1318 = vpop.f32.mrf.mxu0
    %v1319 = vadd.f32 0.0, %v1318
    %1320 = vmatmul.f32.gmra.mxu0 %v1281
    %v1321 = vpop.f32.mrf.mxu0
    %v1322 = vadd.f32 0.0, %v1321
    %1323 = vdwg.mxu0
    %v1324 = vadd.f32 %v1301, %v1313
    %v1325 = vadd.f32 %v1304, %v1316
    %v1326 = vadd.f32 %v1307, %v1319
    %v1327 = vadd.f32 %v1310, %v1322
    %v1328 = vld [vmem:[#allocation2 + $0x7] sm:$0x1]
    %v1329 = vperm.slane %v1328, 0
    %v1330 = vadd.f32 %v1324, %v1329
    %v1331 = vadd.f32 %v1325, %v1329
    %v1332 = vadd.f32 %v1326, %v1329
    %v1333 = vadd.f32 %v1327, %v1329
    %v1334 = vadd.f32 %v1330, %v872
    %v1335 = vadd.f32 %v1331, %v873
    %v1336 = vadd.f32 %v1332, %v874
    %v1337 = vadd.f32 %v1333, %v875
    %v1338 = vld [vmem:[#allocation2 + $0x8] sm:$0x1]
    %v1339 = vld [vmem:[#allocation2 + $0x9] sm:$0x1]
    %v1340 = vsel %vm103, %v1334, 0.0
    %1341 = vadd.xlane.f32.xlu0 %v1340
    %v1342 = vpop.xlane.xlu0 %1341
    %v1343 = vsel %vm103, %v1335, 0.0
    %1344 = vadd.xlane.f32.xlu0 %v1343
    %v1345 = vpop.xlane.xlu0 %1344
    %v1346 = vsel %vm103, %v1336, 0.0
    %1347 = vadd.xlane.f32.xlu0 %v1346
    %v1348 = vpop.xlane.xlu0 %1347
    %v1349 = vsel %vm103, %v1337, 0.0
    %1350 = vadd.xlane.f32.xlu0 %v1349
    %v1351 = vpop.xlane.xlu0 %1350
    %v1352 = vmul.f32 %v1342, %v583
    %v1353 = vmul.f32 %v1345, %v583
    %v1354 = vmul.f32 %v1348, %v583
    %v1355 = vmul.f32 %v1351, %v583
    %v1356 = vsub.f32 %v1334, %v1352
    %v1357 = vsub.f32 %v1335, %v1353
    %v1358 = vsub.f32 %v1336, %v1354
    %v1359 = vsub.f32 %v1337, %v1355
    %v1360 = vmul.f32 %v1356, %v1356
    %v1361 = vmul.f32 %v1357, %v1357
    %v1362 = vmul.f32 %v1358, %v1358
    %v1363 = vmul.f32 %v1359, %v1359
    %v1364 = vsel %vm103, %v1360, 0.0
    %1365 = vadd.xlane.f32.xlu0 %v1364
    %v1366 = vpop.xlane.xlu0 %1365
    %v1367 = vsel %vm103, %v1361, 0.0
    %1368 = vadd.xlane.f32.xlu0 %v1367
    %v1369 = vpop.xlane.xlu0 %1368
    %v1370 = vsel %vm103, %v1362, 0.0
    %1371 = vadd.xlane.f32.xlu0 %v1370
    %v1372 = vpop.xlane.xlu0 %1371
    %v1373 = vsel %vm103, %v1363, 0.0
    %1374 = vadd.xlane.f32.xlu0 %v1373
    %v1375 = vpop.xlane.xlu0 %1374
    %v1376 = vmul.f32 %v1366, %v583
    %v1377 = vmul.f32 %v1369, %v583
    %v1378 = vmul.f32 %v1372, %v583
    %v1379 = vmul.f32 %v1375, %v583
    %v1380 = vadd.f32 %v1376, 1e-05
    %v1381 = vadd.f32 %v1377, 1e-05
    %v1382 = vadd.f32 %v1378, 1e-05
    %v1383 = vadd.f32 %v1379, 1e-05
    %v1384 = vrsqrt.pop %v1380
    %v1385 = vmul.f32 %v1384, %v1380
    %v1386 = vmul.f32 %v1385, %v1384
    %v1387 = vmul.f32 0.5, %v1386
    %v1388 = vsub.f32 1.5, %v1387
    %v1389 = vmul.f32 %v1384, %v1388
    %vm1390 = vweird.f32 %v1380
    %vm1391 = vweird.f32 %v1384
    %vm1392 = vmor %vm1390, %vm1391
    %v1393 = vsel %vm1392, %v1384, %v1389
    %v1394 = vrsqrt.pop %v1381
    %v1395 = vmul.f32 %v1394, %v1381
    %v1396 = vmul.f32 %v1395, %v1394
    %v1397 = vmul.f32 0.5, %v1396
    %v1398 = vsub.f32 1.5, %v1397
    %v1399 = vmul.f32 %v1394, %v1398
    %vm1400 = vweird.f32 %v1381
    %vm1401 = vweird.f32 %v1394
    %vm1402 = vmor %vm1400, %vm1401
    %v1403 = vsel %vm1402, %v1394, %v1399
    %v1404 = vrsqrt.pop %v1382
    %v1405 = vmul.f32 %v1404, %v1382
    %v1406 = vmul.f32 %v1405, %v1404
    %v1407 = vmul.f32 0.5, %v1406
    %v1408 = vsub.f32 1.5, %v1407
    %v1409 = vmul.f32 %v1404, %v1408
    %vm1410 = vweird.f32 %v1382
    %vm1411 = vweird.f32 %v1404
    %vm1412 = vmor %vm1410, %vm1411
    %v1413 = vsel %vm1412, %v1404, %v1409
    %v1414 = vrsqrt.pop %v1383
    %v1415 = vmul.f32 %v1414, %v1383
    %v1416 = vmul.f32 %v1415, %v1414
    %v1417 = vmul.f32 0.5, %v1416
    %v1418 = vsub.f32 1.5, %v1417
    %v1419 = vmul.f32 %v1414, %v1418
    %vm1420 = vweird.f32 %v1383
    %vm1421 = vweird.f32 %v1414
    %vm1422 = vmor %vm1420, %vm1421
    %v1423 = vsel %vm1422, %v1414, %v1419
    %v1424 = vmul.f32 %v1356, %v1393
    %v1425 = vmul.f32 %v1357, %v1403
    %v1426 = vmul.f32 %v1358, %v1413
    %v1427 = vmul.f32 %v1359, %v1423
    %v1428 = vperm.slane %v1338, 0
    %v1429 = vmul.f32 %v1424, %v1428
    %v1430 = vmul.f32 %v1425, %v1428
    %v1431 = vmul.f32 %v1426, %v1428
    %v1432 = vmul.f32 %v1427, %v1428
    %v1433 = vperm.slane %v1339, 0
    %v1434 = vadd.f32 %v1429, %v1433
    %v1435 = vadd.f32 %v1430, %v1433
    %v1436 = vadd.f32 %v1431, %v1433
    %v1437 = vadd.f32 %v1432, %v1433
    %v1438 = vld [vmem:[#allocation2 + $0xc] sm:$0x1]
    %v1439 = vld [vmem:[#allocation2 + $0xd] sm:$0x1]
    %v1440 = vsel %vm103, %v1434, 0.0
    %1441 = vadd.xlane.f32.xlu0 %v1440
    %v1442 = vpop.xlane.xlu0 %1441
    %v1443 = vsel %vm103, %v1435, 0.0
    %1444 = vadd.xlane.f32.xlu0 %v1443
    %v1445 = vpop.xlane.xlu0 %1444
    %v1446 = vsel %vm103, %v1436, 0.0
    %1447 = vadd.xlane.f32.xlu0 %v1446
    %v1448 = vpop.xlane.xlu0 %1447
    %v1449 = vsel %vm103, %v1437, 0.0
    %1450 = vadd.xlane.f32.xlu0 %v1449
    %v1451 = vpop.xlane.xlu0 %1450
    %v1452 = vmul.f32 %v1442, %v583
    %v1453 = vmul.f32 %v1445, %v583
    %v1454 = vmul.f32 %v1448, %v583
    %v1455 = vmul.f32 %v1451, %v583
    %v1456 = vsub.f32 %v1434, %v1452
    %v1457 = vsub.f32 %v1435, %v1453
    %v1458 = vsub.f32 %v1436, %v1454
    %v1459 = vsub.f32 %v1437, %v1455
    %v1460 = vmul.f32 %v1456, %v1456
    %v1461 = vmul.f32 %v1457, %v1457
    %v1462 = vmul.f32 %v1458, %v1458
    %v1463 = vmul.f32 %v1459, %v1459
    %v1464 = vsel %vm103, %v1460, 0.0
    %1465 = vadd.xlane.f32.xlu0 %v1464
    %v1466 = vpop.xlane.xlu0 %1465
    %v1467 = vsel %vm103, %v1461, 0.0
    %1468 = vadd.xlane.f32.xlu0 %v1467
    %v1469 = vpop.xlane.xlu0 %1468
    %v1470 = vsel %vm103, %v1462, 0.0
    %1471 = vadd.xlane.f32.xlu0 %v1470
    %v1472 = vpop.xlane.xlu0 %1471
    %v1473 = vsel %vm103, %v1463, 0.0
    %1474 = vadd.xlane.f32.xlu0 %v1473
    %v1475 = vpop.xlane.xlu0 %1474
    %v1476 = vmul.f32 %v1466, %v583
    %v1477 = vmul.f32 %v1469, %v583
    %v1478 = vmul.f32 %v1472, %v583
    %v1479 = vmul.f32 %v1475, %v583
    %v1480 = vadd.f32 %v1476, 1e-06
    %v1481 = vadd.f32 %v1477, 1e-06
    %v1482 = vadd.f32 %v1478, 1e-06
    %v1483 = vadd.f32 %v1479, 1e-06
    %v1484 = vrsqrt.pop %v1480
    %v1485 = vmul.f32 %v1484, %v1480
    %v1486 = vmul.f32 %v1485, %v1484
    %v1487 = vmul.f32 0.5, %v1486
    %v1488 = vsub.f32 1.5, %v1487
    %v1489 = vmul.f32 %v1484, %v1488
    %vm1490 = vweird.f32 %v1480
    %vm1491 = vweird.f32 %v1484
    %vm1492 = vmor %vm1490, %vm1491
    %v1493 = vsel %vm1492, %v1484, %v1489
    %v1494 = vrsqrt.pop %v1481
    %v1495 = vmul.f32 %v1494, %v1481
    %v1496 = vmul.f32 %v1495, %v1494
    %v1497 = vmul.f32 0.5, %v1496
    %v1498 = vsub.f32 1.5, %v1497
    %v1499 = vmul.f32 %v1494, %v1498
    %vm1500 = vweird.f32 %v1481
    %vm1501 = vweird.f32 %v1494
    %vm1502 = vmor %vm1500, %vm1501
    %v1503 = vsel %vm1502, %v1494, %v1499
    %v1504 = vrsqrt.pop %v1482
    %v1505 = vmul.f32 %v1504, %v1482
    %v1506 = vmul.f32 %v1505, %v1504
    %v1507 = vmul.f32 0.5, %v1506
    %v1508 = vsub.f32 1.5, %v1507
    %v1509 = vmul.f32 %v1504, %v1508
    %vm1510 = vweird.f32 %v1482
    %vm1511 = vweird.f32 %v1504
    %vm1512 = vmor %vm1510, %vm1511
    %v1513 = vsel %vm1512, %v1504, %v1509
    %v1514 = vrsqrt.pop %v1483
    %v1515 = vmul.f32 %v1514, %v1483
    %v1516 = vmul.f32 %v1515, %v1514
    %v1517 = vmul.f32 0.5, %v1516
    %v1518 = vsub.f32 1.5, %v1517
    %v1519 = vmul.f32 %v1514, %v1518
    %vm1520 = vweird.f32 %v1483
    %vm1521 = vweird.f32 %v1514
    %vm1522 = vmor %vm1520, %vm1521
    %v1523 = vsel %vm1522, %v1514, %v1519
    %v1524 = vmul.f32 %v1456, %v1493
    %v1525 = vmul.f32 %v1457, %v1503
    %v1526 = vmul.f32 %v1458, %v1513
    %v1527 = vmul.f32 %v1459, %v1523
    %v1528 = vperm.slane %v1438, 0
    %v1529 = vmul.f32 %v1524, %v1528
    %v1530 = vmul.f32 %v1525, %v1528
    %v1531 = vmul.f32 %v1526, %v1528
    %v1532 = vmul.f32 %v1527, %v1528
    %v1533 = vperm.slane %v1439, 0
    %v1534 = vadd.f32 %v1529, %v1533
    %v1535 = vadd.f32 %v1530, %v1533
    %v1536 = vadd.f32 %v1531, %v1533
    %v1537 = vadd.f32 %v1532, %v1533
    %s1538 = scalar_lea.vmem %s3, 32
    %v1539 = vld [vmem:[%s1538] sm:$0xff]
    %v1540 = vld [vmem:[%s1538 + $0x8] sm:$0xff]
    %v1541 = vld [vmem:[%s1538 + $0x10] sm:$0xff]
    %v1542 = vld [vmem:[%s1538 + $0x18] sm:$0xff]
    %v1543 = vld [vmem:[#allocation2 + $0xa] sm:$0x1]
    %v1544 = vperm.slane %v1543, 0
    %v1546 = vsel %vm103, %v1534, 0
    %v1549 = vsel %vm103, %v1535, 0
    %v1552 = vsel %vm103, %v1536, 0
    %v1555 = vsel %vm103, %v1537, 0
    %1557 = vmatpush.msra.mxu0 0.0
    %1558 = vmatpush.msra.mxu0 0.0
    %1559 = vmatpush.msra.mxu0 0.0
    %1560 = vmatpush.msra.mxu0 0.0
    %1561 = vmatpush.msra.mxu0 0.0
    %1562 = vmatpush.msra.mxu0 0.0
    %1563 = vmatpush.msra.mxu0 0.0
    %1564 = vmatpush.msra.mxu0 0.0
    %1565 = vmatpush.msra.mxu0 0.0
    %1566 = vmatpush.msra.mxu0 0.0
    %1567 = vmatpush.msra.mxu0 0.0
    %1568 = vmatpush.msra.mxu0 0.0
    %1569 = vmatpush.msra.mxu0 %v1542
    %1570 = vmatpush.msra.mxu0 %v1541
    %1571 = vmatpush.msra.mxu0 %v1540
    %1572 = vmatpush.msra.mxu0 %v1539
    %1573 = vmatmul.f32.gmra.mxu0 %v1546
    %v1574 = vpop.f32.mrf.mxu0
    %v1575 = vadd.f32 %v1544, %v1574
    %1576 = vmatmul.f32.gmra.mxu0 %v1549
    %v1577 = vpop.f32.mrf.mxu0
    %v1578 = vadd.f32 %v1544, %v1577
    %1579 = vmatmul.f32.gmra.mxu0 %v1552
    %v1580 = vpop.f32.mrf.mxu0
    %v1581 = vadd.f32 %v1544, %v1580
    %1582 = vmatmul.f32.gmra.mxu0 %v1555
    %v1583 = vpop.f32.mrf.mxu0
    %v1584 = vadd.f32 %v1544, %v1583
    %1585 = vdwg.mxu0
    %v1586 = vmax.f32 %v1575, 0.0
    %v1587 = vmax.f32 %v1578, 0.0
    %v1588 = vmax.f32 %v1581, 0.0
    %v1589 = vmax.f32 %v1584, 0.0
    %s1590 = scalar_lea.vmem %s4, 64
    %v1591 = vld [vmem:[%s1590] sm:$0xff]
    %v1592 = vld [vmem:[%s1590 + $0x8] sm:$0xff]
    %v1593 = vld [vmem:[%s1590 + $0x10] sm:$0xff]
    %v1594 = vld [vmem:[%s1590 + $0x18] sm:$0xff]
    %v1595 = vld [vmem:[%s1590 + $0x20] sm:$0xff]
    %v1596 = vld [vmem:[%s1590 + $0x28] sm:$0xff]
    %v1597 = vld [vmem:[%s1590 + $0x30] sm:$0xff]
    %v1598 = vld [vmem:[%s1590 + $0x38] sm:$0xff]
    %v1599 = vld [vmem:[#allocation2 + $0xb] sm:$0x1]
    %v1600 = vperm.slane %v1599, 0
    %v1602 = vsel %vm379, %v1586, 0
    %v1605 = vsel %vm379, %v1587, 0
    %v1608 = vsel %vm379, %v1588, 0
    %v1611 = vsel %vm379, %v1589, 0
    %1613 = vmatpush.msra.mxu0 0.0
    %1614 = vmatpush.msra.mxu0 0.0
    %1615 = vmatpush.msra.mxu0 0.0
    %1616 = vmatpush.msra.mxu0 0.0
    %1617 = vmatpush.msra.mxu0 0.0
    %1618 = vmatpush.msra.mxu0 0.0
    %1619 = vmatpush.msra.mxu0 0.0
    %1620 = vmatpush.msra.mxu0 0.0
    %1621 = vmatpush.msra.mxu0 %v1598
    %1622 = vmatpush.msra.mxu0 %v1597
    %1623 = vmatpush.msra.mxu0 %v1596
    %1624 = vmatpush.msra.mxu0 %v1595
    %1625 = vmatpush.msra.mxu0 %v1594
    %1626 = vmatpush.msra.mxu0 %v1593
    %1627 = vmatpush.msra.mxu0 %v1592
    %1628 = vmatpush.msra.mxu0 %v1591
    %1629 = vmatmul.f32.gmra.mxu0 %v1602
    %v1630 = vpop.f32.mrf.mxu0
    %v1631 = vadd.f32 %v1600, %v1630
    %1632 = vmatmul.f32.gmra.mxu0 %v1605
    %v1633 = vpop.f32.mrf.mxu0
    %v1634 = vadd.f32 %v1600, %v1633
    %1635 = vmatmul.f32.gmra.mxu0 %v1608
    %v1636 = vpop.f32.mrf.mxu0
    %v1637 = vadd.f32 %v1600, %v1636
    %1638 = vmatmul.f32.gmra.mxu0 %v1611
    %v1639 = vpop.f32.mrf.mxu0
    %v1640 = vadd.f32 %v1600, %v1639
    %1641 = vdwg.mxu0
    %v1642 = vadd.f32 %v1631, %v1434
    %v1643 = vadd.f32 %v1634, %v1435
    %v1644 = vadd.f32 %v1637, %v1436
    %v1645 = vadd.f32 %v1640, %v1437
    %v1646 = vld [vmem:[#allocation2 + $0x10] sm:$0xff]
    %v1647 = vld [vmem:[#allocation2 + $0x18] sm:$0xff]
    %v1648 = vld [vmem:[#allocation2 + $0x20] sm:$0xff]
    %v1649 = vld [vmem:[#allocation2 + $0x28] sm:$0xff]
    %v1650 = vld [vmem:[#allocation2 + $0xe] sm:$0x1]
    %v1651 = vperm.slane %v1650, 0
    %v1653 = vsel %vm103, %v1642, 0
    %v1656 = vsel %vm103, %v1643, 0
    %v1659 = vsel %vm103, %v1644, 0
    %v1662 = vsel %vm103, %v1645, 0
    %1664 = vmatpush.msra.mxu0 0.0
    %1665 = vmatpush.msra.mxu0 0.0
    %1666 = vmatpush.msra.mxu0 0.0
    %1667 = vmatpush.msra.mxu0 0.0
    %1668 = vmatpush.msra.mxu0 0.0
    %1669 = vmatpush.msra.mxu0 0.0
    %1670 = vmatpush.msra.mxu0 0.0
    %1671 = vmatpush.msra.mxu0 0.0
    %1672 = vmatpush.msra.mxu0 0.0
    %1673 = vmatpush.msra.mxu0 0.0
    %1674 = vmatpush.msra.mxu0 0.0
    %1675 = vmatpush.msra.mxu0 0.0
    %1676 = vmatpush.msra.mxu0 %v1649
    %1677 = vmatpush.msra.mxu0 %v1648
    %1678 = vmatpush.msra.mxu0 %v1647
    %1679 = vmatpush.msra.mxu0 %v1646
    %1680 = vmatmul.f32.gmra.mxu0 %v1653
    %v1681 = vpop.f32.mrf.mxu0
    %v1682 = vadd.f32 %v1651, %v1681
    %1683 = vmatmul.f32.gmra.mxu0 %v1656
    %v1684 = vpop.f32.mrf.mxu0
    %v1685 = vadd.f32 %v1651, %v1684
    %1686 = vmatmul.f32.gmra.mxu0 %v1659
    %v1687 = vpop.f32.mrf.mxu0
    %v1688 = vadd.f32 %v1651, %v1687
    %1689 = vmatmul.f32.gmra.mxu0 %v1662
    %v1690 = vpop.f32.mrf.mxu0
    %v1691 = vadd.f32 %v1651, %v1690
    %1692 = vdwg.mxu0
    %1693 = vrot.lane.b32.xlu0 %v39, 4
    %v1694 = vpop.permute.xlu0 %1693
    %1695 = vrot.lane.b32.xlu0 %v40, 4
    %v1696 = vpop.permute.xlu0 %1695
    %1697 = vrot.lane.b32.xlu0 %v41, 4
    %v1698 = vpop.permute.xlu0 %1697
    %1699 = vrot.lane.b32.xlu0 %v42, 4
    %v1700 = vpop.permute.xlu0 %1699
    %v1705 = vmul.f32 %v39, %v1694
    %v1706 = vmul.f32 %v40, %v1696
    %v1707 = vmul.f32 %v41, %v1698
    %v1708 = vmul.f32 %v42, %v1700
    %v1709 = vsub.f32 1.0, %v39
    %v1710 = vsub.f32 1.0, %v40
    %v1711 = vsub.f32 1.0, %v41
    %v1712 = vsub.f32 1.0, %v42
    %1717 = vrot.lane.b32.xlu0 %v1682, 4
    %v1718 = vpop.permute.xlu0 %1717
    %1719 = vrot.lane.b32.xlu0 %v1685, 4
    %v1720 = vpop.permute.xlu0 %1719
    %1721 = vrot.lane.b32.xlu0 %v1688, 4
    %v1722 = vpop.permute.xlu0 %1721
    %1723 = vrot.lane.b32.xlu0 %v1691, 4
    %v1724 = vpop.permute.xlu0 %1723
    %v1729 = vmul.f32 %v1709, %v1718
    %v1730 = vmul.f32 %v1710, %v1720
    %v1731 = vmul.f32 %v1711, %v1722
    %v1732 = vmul.f32 %v1712, %v1724
    %v1733 = vadd.f32 %v1705, %v1729
    %v1734 = vadd.f32 %v1706, %v1730
    %v1735 = vadd.f32 %v1707, %v1731
    %v1736 = vadd.f32 %v1708, %v1732
    %1741 = vrot.lane.b32.xlu0 %v1733, 124
    %v1742 = vpop.permute.xlu0 %1741
    %1743 = vrot.lane.b32.xlu0 %v1734, 124
    %v1744 = vpop.permute.xlu0 %1743
    %1745 = vrot.lane.b32.xlu0 %v1735, 124
    %v1746 = vpop.permute.xlu0 %1745
    %1747 = vrot.lane.b32.xlu0 %v1736, 124
    %v1748 = vpop.permute.xlu0 %1747
    %vm1753 = vcmask 31744
    %1754 = vst.msk [vmem:[%s6] sm:$0xff] %vm1753, %v1742
    %1755 = vst.msk [vmem:[%s6 + $0x8] sm:$0xff] %vm1753, %v1744
    %1756 = vst.msk [vmem:[%s6 + $0x10] sm:$0xff] %vm1753, %v1746
    %1757 = vst.msk [vmem:[%s6 + $0x18] sm:$0xff] %vm1753, %v1748
    // Predicated region
    $region30: #{reformer_forward.1} parent=1 // pred_check
      _
    $region31: #{reformer_forward.1} parent=1 // pred_check_branch
      %1759 = sbr.rel (0) target = $region33
    $region32: #{reformer_forward.1} parent=1 // pred_region
      _
    $region33: #{reformer_forward.1} parent=1 // pred_fallthru
      _
    // Predicated region
    $region34: #{reformer_forward.1} parent=1 // pred_check
      _
    $region35: #{reformer_forward.1} parent=1 // pred_check_branch
      %1761 = sbr.rel (0) target = $region37
    $region36: #{reformer_forward.1} parent=1 // pred_region
      _
    $region37: #{reformer_forward.1} parent=1 // pred_fallthru
      _
    %1762 = vsyncpa [#allocation3], 1

</llo_original>
